<compile_context>
chip_gen: v5e
topology: v5e:2x2
jax: 0.10.0
libtpu: 0.0.40
codegen_flags: <defaults>
</compile_context>

<pallas_src>
import math

import jax
import jax.numpy as jnp
from jax.experimental import pallas as pl
from jax.experimental.pallas import tpu as pltpu

# ----------------------------- model dimensions -----------------------------
FEAT_DIM = 32                      # synthetic backbone feature dim
EMBED_DIM = 16                     # region embedding dim
ANGLE_DIM = 2
HEAD_DIM = 128                     # first hidden width of each head (hd2 = 64)

LANE = 128
EMB_OFF = FEAT_DIM                 # feat  -> lanes [0, 32)
ANGLE_OFF = FEAT_DIM + EMBED_DIM   # emb   -> lanes [32, 48), angle -> [48, 50)
COMBINED = FEAT_DIM + EMBED_DIM + ANGLE_DIM   # 50 logical combined features
COMB_PAD = LANE                    # padded combined width
COUT_PAD = LANE                    # padded backbone conv output width
OUT_PAD = LANE                     # padded (lat, lon) output width
H1 = 2 * HEAD_DIM                  # merged first hidden width  (lat | lon)
H2 = 2 * (HEAD_DIM // 2)           # merged second hidden width (lat | lon)


# --------------------------------------------------------------------------
# The single fused kernel.  grid = (B // TB,), "parallel".
# All refs are 2-D VMEM blocks; weights are resident (constant index_map).
# --------------------------------------------------------------------------
def fused_kernel(patches_ref, extras_ref, w_conv_ref, b_conv_ref,
                 w1_ref, b1_ref, w2_ref, b2_ref, w3_ref, b3_ref, out_ref):
    tb = out_ref.shape[0]
    hw = patches_ref.shape[0] // tb

    # ---- synthetic backbone: 3x3-conv-as-matmul over all TB*HW patch rows,
    #      ReLU, then per-sample global average pool (XLU reduce -> free slot).
    y = jnp.dot(patches_ref[...], w_conv_ref[...],
                preferred_element_type=jnp.float32)              # (TB*HW, 128) f32
    y = jnp.maximum(y + b_conv_ref[...], 0.0)
    feat = jnp.mean(y.reshape(tb, hw, COUT_PAD), axis=1)         # (TB, 128) f32

    # ---- concat([feat, emb, angle]) == lane-disjoint add: extras already
    #      holds emb (+ angle) in their padded lane positions (wrapper-side).
    x = (feat + extras_ref[...]).astype(jnp.bfloat16)            # (TB, 128)

    # ---- both regression heads fused (dropout = eval-mode identity):
    #      wide layer-1, block-diagonal layer-2, lat->lane0 / lon->lane1 layer-3.
    h1 = jnp.maximum(
        jnp.dot(x, w1_ref[...], preferred_element_type=jnp.float32) + b1_ref[...],
        0.0).astype(jnp.bfloat16)                                # (TB, 256)
    h2 = jnp.maximum(
        jnp.dot(h1, w2_ref[...], preferred_element_type=jnp.float32) + b2_ref[...],
        0.0).astype(jnp.bfloat16)                                # (TB, 128)
    out_ref[...] = (jnp.dot(h2, w3_ref[...], preferred_element_type=jnp.float32)
                    + b3_ref[...])                               # (TB, 128) lane-dense


def fused_forward_pallas(patches2d, extras, params, *, tb, hw):
    bp = extras.shape[0]                 # padded batch (multiple of tb)
    kp = patches2d.shape[1]
    n_tiles = bp // tb

    def weight_spec(shape):
        # Constant index_map -> block is DMA'd once and stays resident in VMEM.
        return pl.BlockSpec(shape, lambda i: (0, 0))

    return pl.pallas_call(
        fused_kernel,
        out_shape=jax.ShapeDtypeStruct((bp, OUT_PAD), jnp.float32),
        grid=(n_tiles,),
        in_specs=[
            pl.BlockSpec((tb * hw, kp), lambda i: (i, 0)),       # patch rows (per tile)
            pl.BlockSpec((tb, COMB_PAD), lambda i: (i, 0)),      # emb+angle extras (per tile)
            weight_spec((kp, COUT_PAD)),                         # w_conv
            weight_spec((1, COUT_PAD)),                          # b_conv
            weight_spec((COMB_PAD, H1)),                         # w1 (lat | lon)
            weight_spec((1, H1)),                                # b1
            weight_spec((H1, H2)),                               # w2 (block-diagonal)
            weight_spec((1, H2)),                                # b2
            weight_spec((H2, OUT_PAD)),                          # w3 (lat->lane0, lon->lane1)
            weight_spec((1, OUT_PAD)),                           # b3
        ],
        out_specs=pl.BlockSpec((tb, OUT_PAD), lambda i: (i, 0)),
        compiler_params=pltpu.CompilerParams(
            dimension_semantics=("parallel",),    # batch tiles split across TCs (v7x)
            vmem_limit_bytes=32 * 1024 * 1024,    # ~2 MiB used; well under v7x 64 MiB
        ),
    )(patches2d, extras, params["w_conv"], params["b_conv"],
      params["w1"], params["b1"], params["w2"], params["b2"],
      params["w3"], params["b3"])


# --------------------------------------------------------------------------
# Wrapper-side glue: patch extraction, lane padding, batch padding, params.
# --------------------------------------------------------------------------
def extract_patches(image_nchw):
    """(B, C, H, W) NCHW -> (B, H*W, 9*C) 3x3 SAME patches (single XLA op)."""
    B, C, H, W = image_nchw.shape
    p = jax.lax.conv_general_dilated_patches(
        image_nchw, filter_shape=(3, 3), window_strides=(1, 1), padding="SAME")
    p = jnp.transpose(p, (0, 2, 3, 1))                           # (B, H, W, 9*C)
    # TODO(synk): at resnet-scale image sizes accumulate the 3x3 taps inside
    # the kernel from the padded image to avoid the 9x patch HBM inflation
    # (first wall on v5e); negligible at these toy sizes.
    return p.reshape(B, H * W, 9 * C)


def _prepare_inputs(params, image, region, angle):
    B = image.shape[0]
    k_pad = params["w_conv"].shape[0]
    patches = extract_patches(image)                             # (B, HW, 9*Cin) f32
    hw = patches.shape[1]
    patches = jnp.pad(patches, ((0, 0), (0, 0), (0, k_pad - patches.shape[2])))
    patches2d = patches.reshape(B * hw, k_pad).astype(jnp.bfloat16)
    # Region-embedding gather + angle placement done in the wrapper so the
    # kernel sees one lane-dense (TB, 128) block per tile (no SMEM prefetch,
    # no per-row dynamic sublane gather inside the kernel).
    angle_pad = jnp.zeros((B, COMB_PAD), jnp.float32)
    angle_pad = angle_pad.at[:, ANGLE_OFF:ANGLE_OFF + angle.shape[1]].set(
        angle.astype(jnp.float32))
    extras = params["emb"][region] + angle_pad                   # (B, 128) f32
    return patches2d, extras, hw


def geo_regressor_forward(params, image, region, angle, *, tb=8):
    """Mirrors GeoRegressor.forward (eval mode): returns (raw_lat, raw_lon), each (B,)."""
    B = image.shape[0]
    patches2d, extras, hw = _prepare_inputs(params, image, region, angle)
    bp = ((B + tb - 1) // tb) * tb
    if bp != B:                                                  # pad batch to a tile multiple
        patches2d = jnp.pad(patches2d, ((0, (bp - B) * hw), (0, 0)))
        extras = jnp.pad(extras, ((0, bp - B), (0, 0)))
    out = fused_forward_pallas(patches2d, extras, params, tb=tb, hw=hw)
    return out[:B, 0], out[:B, 1]


def reference_forward(params, image, region, angle):
    """Pure-jnp reference with the same padded / bf16-operand math (for checking)."""
    patches2d, extras, hw = _prepare_inputs(params, image, region, angle)
    B = extras.shape[0]
    y = jnp.dot(patches2d, params["w_conv"],
                preferred_element_type=jnp.float32) + params["b_conv"]
    feat = jnp.mean(jnp.maximum(y, 0.0).reshape(B, hw, COUT_PAD), axis=1)
    x = (feat + extras).astype(jnp.bfloat16)
    h1 = jnp.maximum(jnp.dot(x, params["w1"], preferred_element_type=jnp.float32)
                     + params["b1"], 0.0).astype(jnp.bfloat16)
    h2 = jnp.maximum(jnp.dot(h1, params["w2"], preferred_element_type=jnp.float32)
                     + params["b2"], 0.0).astype(jnp.bfloat16)
    o = jnp.dot(h2, params["w3"], preferred_element_type=jnp.float32) + params["b3"]
    return o[:, 0], o[:, 1]


def linear_init(key, shape, fan_in):
    bound = 1.0 / math.sqrt(fan_in)
    return jax.random.uniform(key, shape, minval=-bound, maxval=bound,
                              dtype=jnp.float32)


def make_params(key, cin, num_regions):
    k = 9 * cin
    k_pad = ((k + 7) // 8) * 8
    hd, hd2 = HEAD_DIM, HEAD_DIM // 2
    ks = jax.random.split(key, 15)

    # synthetic backbone: 3x3 conv (cin -> FEAT_DIM) + bias, zero-padded so the
    # extra lanes stay exactly zero through ReLU + mean pool.
    w_conv = linear_init(ks[0], (k, FEAT_DIM), k)
    b_conv = linear_init(ks[1], (FEAT_DIM,), k)
    w_conv_p = jnp.zeros((k_pad, COUT_PAD), jnp.float32).at[:k, :FEAT_DIM].set(w_conv)
    b_conv_p = jnp.zeros((1, COUT_PAD), jnp.float32).at[0, :FEAT_DIM].set(b_conv)

    # region embedding (PyTorch default N(0,1)) placed at lanes [EMB_OFF, +EMBED_DIM)
    emb = jax.random.normal(ks[2], (num_regions, EMBED_DIM), dtype=jnp.float32)
    emb_p = jnp.zeros((num_regions, COMB_PAD), jnp.float32)
    emb_p = emb_p.at[:, EMB_OFF:EMB_OFF + EMBED_DIM].set(emb)

    def head(keys):
        w1 = linear_init(keys[0], (COMBINED, hd), COMBINED)
        b1 = linear_init(keys[1], (hd,), COMBINED)
        w2 = linear_init(keys[2], (hd, hd2), hd)
        b2 = linear_init(keys[3], (hd2,), hd)
        w3 = linear_init(keys[4], (hd2, 1), hd2)
        b3 = linear_init(keys[5], (1,), hd2)
        return w1, b1, w2, b2, w3, b3

    lat = head(ks[3:9])
    lon = head(ks[9:15])

    # merged layer 1: (COMB_PAD, 2*hd); rows [COMBINED:] are zero (padded lanes)
    w1 = jnp.zeros((COMB_PAD, H1), jnp.float32)
    w1 = w1.at[:COMBINED, :hd].set(lat[0]).at[:COMBINED, hd:].set(lon[0])
    b1 = jnp.concatenate([lat[1], lon[1]])[None, :]              # (1, 256)
    # merged layer 2: block-diagonal (2*hd, 2*hd2) so heads stay independent
    w2 = jnp.zeros((H1, H2), jnp.float32)
    w2 = w2.at[:hd, :hd2].set(lat[2]).at[hd:, hd2:].set(lon[2])
    b2 = jnp.concatenate([lat[3], lon[3]])[None, :]              # (1, 128)
    # merged layer 3: lat -> lane 0, lon -> lane 1, lanes [2:] zero
    w3 = jnp.zeros((H2, OUT_PAD), jnp.float32)
    w3 = w3.at[:hd2, 0].set(lat[4][:, 0]).at[hd2:, 1].set(lon[4][:, 0])
    b3 = jnp.zeros((1, OUT_PAD), jnp.float32).at[0, 0].set(lat[5][0]).at[0, 1].set(lon[5][0])

    return {
        "w_conv": w_conv_p.astype(jnp.bfloat16), "b_conv": b_conv_p,
        "emb": emb_p,
        "w1": w1.astype(jnp.bfloat16), "b1": b1,
        "w2": w2.astype(jnp.bfloat16), "b2": b2,
        "w3": w3.astype(jnp.bfloat16), "b3": b3,
    }


if __name__ == "__main__":
    B, CIN, H, W = 16, 3, 16, 16
    TB = 8                 # batch tile: grid = (2,) so both v7x TCs get work
    NUM_REGIONS = 10

    key = jax.random.PRNGKey(0)
    k_img, k_reg, k_ang, k_par = jax.random.split(key, 4)

    image = jax.random.normal(k_img, (B, CIN, H, W), dtype=jnp.float32)      # NCHW
    region = jax.random.randint(k_reg, (B,), 0, NUM_REGIONS, dtype=jnp.int32)
    angle = jax.random.normal(k_ang, (B, ANGLE_DIM), dtype=jnp.float32)

    params = make_params(k_par, CIN, NUM_REGIONS)

    fwd = jax.jit(geo_regressor_forward, static_argnames=("tb",))
    raw_lat, raw_lon = fwd(params, image, region, angle, tb=TB)
    raw_lat = jax.block_until_ready(raw_lat)
    raw_lon = jax.block_until_ready(raw_lon)

    assert raw_lat.shape == (B,) and raw_lon.shape == (B,)
    assert raw_lat.dtype == jnp.float32 and raw_lon.dtype == jnp.float32

    ref_lat, ref_lon = reference_forward(params, image, region, angle)
    assert bool(jnp.allclose(raw_lat, ref_lat, rtol=5e-2, atol=5e-2))
    assert bool(jnp.allclose(raw_lon, ref_lon, rtol=5e-2, atol=5e-2))

    # TODO(synk): the pretrained torchvision backbone (e.g. resnet18) is not
    # reproduced; it is replaced by the synthetic conv + global-pool backbone.
    print("KERNEL_OK")
</pallas_src>

<mosaic_0001>
module attributes {stable_mosaic.version = 11 : i64} {
  func.func @fused_kernel(%arg0: i32, %arg1: memref<2048x32xbf16, #tpu.memory_space<vmem>>, %arg2: memref<8x128xf32, #tpu.memory_space<vmem>>, %arg3: memref<32x128xbf16, #tpu.memory_space<vmem>>, %arg4: memref<1x128xf32, #tpu.memory_space<vmem>>, %arg5: memref<128x256xbf16, #tpu.memory_space<vmem>>, %arg6: memref<1x256xf32, #tpu.memory_space<vmem>>, %arg7: memref<256x128xbf16, #tpu.memory_space<vmem>>, %arg8: memref<1x128xf32, #tpu.memory_space<vmem>>, %arg9: memref<128x128xbf16, #tpu.memory_space<vmem>>, %arg10: memref<1x128xf32, #tpu.memory_space<vmem>>, %arg11: memref<8x128xf32, #tpu.memory_space<vmem>>) attributes {dimension_semantics = [#tpu.dimension_semantics<parallel>], iteration_bounds = array<i64: 2>, scalar_prefetch = 0 : i64, scratch_operands = 0 : i64, tpu.core_type = #tpu.core_type<tc>, window_params = [{transform_indices = @transform_0, window_bounds = array<i64: 2048, 32>}, {transform_indices = @transform_1, window_bounds = array<i64: 8, 128>}, {pipeline_mode = #tpu.pipeline_mode<synchronous>, transform_indices = @transform_2, window_bounds = array<i64: 32, 128>}, {pipeline_mode = #tpu.pipeline_mode<synchronous>, transform_indices = @transform_3, window_bounds = array<i64: 1, 128>}, {pipeline_mode = #tpu.pipeline_mode<synchronous>, transform_indices = @transform_4, window_bounds = array<i64: 128, 256>}, {pipeline_mode = #tpu.pipeline_mode<synchronous>, transform_indices = @transform_5, window_bounds = array<i64: 1, 256>}, {pipeline_mode = #tpu.pipeline_mode<synchronous>, transform_indices = @transform_6, window_bounds = array<i64: 256, 128>}, {pipeline_mode = #tpu.pipeline_mode<synchronous>, transform_indices = @transform_7, window_bounds = array<i64: 1, 128>}, {pipeline_mode = #tpu.pipeline_mode<synchronous>, transform_indices = @transform_8, window_bounds = array<i64: 128, 128>}, {pipeline_mode = #tpu.pipeline_mode<synchronous>, transform_indices = @transform_9, window_bounds = array<i64: 1, 128>}, {transform_indices = @transform_10, window_bounds = array<i64: 8, 128>}]} {
    %c0 = arith.constant 0 : index
    %c0_0 = arith.constant 0 : index
    %0 = vector.load %arg1[%c0, %c0_0] : memref<2048x32xbf16, #tpu.memory_space<vmem>>, vector<2048x32xbf16>
    %c0_1 = arith.constant 0 : index
    %c0_2 = arith.constant 0 : index
    %1 = vector.load %arg3[%c0_1, %c0_2] : memref<32x128xbf16, #tpu.memory_space<vmem>>, vector<32x128xbf16>
    %cst = arith.constant dense<0.000000e+00> : vector<2048x128xf32>
    %2 = tpu.matmul %0, %1, %cst {dimension_numbers = #tpu.dot_dimension_numbers<[1], [0], [0], [1], [0, 0, 1, 1], [], []>} : vector<2048x32xbf16>, vector<32x128xbf16>, vector<2048x128xf32> -> vector<2048x128xf32>
    %c0_3 = arith.constant 0 : index
    %c0_4 = arith.constant 0 : index
    %3 = vector.load %arg4[%c0_3, %c0_4] : memref<1x128xf32, #tpu.memory_space<vmem>>, vector<1x128xf32>
    %4 = vector.broadcast %3 : vector<1x128xf32> to vector<2048x128xf32>
    %5 = arith.addf %2, %4 : vector<2048x128xf32>
    %cst_5 = arith.constant 0.000000e+00 : f32
    %6 = vector.broadcast %cst_5 : f32 to vector<2048x128xf32>
    %7 = arith.maximumf %5, %6 : vector<2048x128xf32>
    %8 = vector.shape_cast %7 : vector<2048x128xf32> to vector<8x256x128xf32>
    %cst_6 = arith.constant dense<0.000000e+00> : vector<8x128xf32>
    %9 = vector.multi_reduction <add>, %8, %cst_6 [1] : vector<8x256x128xf32> to vector<8x128xf32>
    %cst_7 = arith.constant 2.560000e+02 : f32
    %10 = vector.broadcast %cst_7 : f32 to vector<8x128xf32>
    %11 = arith.divf %9, %10 : vector<8x128xf32>
    %c0_8 = arith.constant 0 : index
    %c0_9 = arith.constant 0 : index
    %12 = vector.load %arg2[%c0_8, %c0_9] : memref<8x128xf32, #tpu.memory_space<vmem>>, vector<8x128xf32>
    %13 = arith.addf %11, %12 : vector<8x128xf32>
    %14 = arith.truncf %13 : vector<8x128xf32> to vector<8x128xbf16>
    %c0_10 = arith.constant 0 : index
    %c0_11 = arith.constant 0 : index
    %15 = vector.load %arg5[%c0_10, %c0_11] : memref<128x256xbf16, #tpu.memory_space<vmem>>, vector<128x256xbf16>
    %cst_12 = arith.constant dense<0.000000e+00> : vector<8x256xf32>
    %16 = tpu.matmul %14, %15, %cst_12 {dimension_numbers = #tpu.dot_dimension_numbers<[1], [0], [0], [1], [0, 0, 1, 1], [], []>} : vector<8x128xbf16>, vector<128x256xbf16>, vector<8x256xf32> -> vector<8x256xf32>
    %c0_13 = arith.constant 0 : index
    %c0_14 = arith.constant 0 : index
    %17 = vector.load %arg6[%c0_13, %c0_14] : memref<1x256xf32, #tpu.memory_space<vmem>>, vector<1x256xf32>
    %18 = vector.broadcast %17 : vector<1x256xf32> to vector<8x256xf32>
    %19 = arith.addf %16, %18 : vector<8x256xf32>
    %cst_15 = arith.constant 0.000000e+00 : f32
    %20 = vector.broadcast %cst_15 : f32 to vector<8x256xf32>
    %21 = arith.maximumf %19, %20 : vector<8x256xf32>
    %22 = arith.truncf %21 : vector<8x256xf32> to vector<8x256xbf16>
    %c0_16 = arith.constant 0 : index
    %c0_17 = arith.constant 0 : index
    %23 = vector.load %arg7[%c0_16, %c0_17] : memref<256x128xbf16, #tpu.memory_space<vmem>>, vector<256x128xbf16>
    %cst_18 = arith.constant dense<0.000000e+00> : vector<8x128xf32>
    %24 = tpu.matmul %22, %23, %cst_18 {dimension_numbers = #tpu.dot_dimension_numbers<[1], [0], [0], [1], [0, 0, 1, 1], [], []>} : vector<8x256xbf16>, vector<256x128xbf16>, vector<8x128xf32> -> vector<8x128xf32>
    %c0_19 = arith.constant 0 : index
    %c0_20 = arith.constant 0 : index
    %25 = vector.load %arg8[%c0_19, %c0_20] : memref<1x128xf32, #tpu.memory_space<vmem>>, vector<1x128xf32>
    %26 = vector.broadcast %25 : vector<1x128xf32> to vector<8x128xf32>
    %27 = arith.addf %24, %26 : vector<8x128xf32>
    %cst_21 = arith.constant 0.000000e+00 : f32
    %28 = vector.broadcast %cst_21 : f32 to vector<8x128xf32>
    %29 = arith.maximumf %27, %28 : vector<8x128xf32>
    %30 = arith.truncf %29 : vector<8x128xf32> to vector<8x128xbf16>
    %c0_22 = arith.constant 0 : index
    %c0_23 = arith.constant 0 : index
    %31 = vector.load %arg9[%c0_22, %c0_23] : memref<128x128xbf16, #tpu.memory_space<vmem>>, vector<128x128xbf16>
    %cst_24 = arith.constant dense<0.000000e+00> : vector<8x128xf32>
    %32 = tpu.matmul %30, %31, %cst_24 {dimension_numbers = #tpu.dot_dimension_numbers<[1], [0], [0], [1], [0, 0, 1, 1], [], []>} : vector<8x128xbf16>, vector<128x128xbf16>, vector<8x128xf32> -> vector<8x128xf32>
    %c0_25 = arith.constant 0 : index
    %c0_26 = arith.constant 0 : index
    %33 = vector.load %arg10[%c0_25, %c0_26] : memref<1x128xf32, #tpu.memory_space<vmem>>, vector<1x128xf32>
    %34 = vector.broadcast %33 : vector<1x128xf32> to vector<8x128xf32>
    %35 = arith.addf %32, %34 : vector<8x128xf32>
    %c0_27 = arith.constant 0 : index
    %c0_28 = arith.constant 0 : index
    %36 = vector.load %arg11[%c0_27, %c0_28] : memref<8x128xf32, #tpu.memory_space<vmem>>, vector<8x128xf32>
    tpu.vector_store %arg11[%c0_27, %c0_28], %35 {strides = array<i32>} : memref<8x128xf32, #tpu.memory_space<vmem>>, vector<8x128xf32>,
    return
  }
  func.func @transform_0(%arg0: i32) -> (i32, i32) {
    %c0_i32 = arith.constant 0 : i32
    %c0_i32_0 = arith.constant 0 : i32
    return %arg0, %c0_i32 : i32, i32
  }
  func.func @transform_1(%arg0: i32) -> (i32, i32) {
    %c0_i32 = arith.constant 0 : i32
    %c0_i32_0 = arith.constant 0 : i32
    return %arg0, %c0_i32 : i32, i32
  }
  func.func @transform_2(%arg0: i32) -> (i32, i32) {
    %c0_i32 = arith.constant 0 : i32
    %c0_i32_0 = arith.constant 0 : i32
    %c0_i32_1 = arith.constant 0 : i32
    return %c0_i32, %c0_i32_0 : i32, i32
  }
  func.func @transform_3(%arg0: i32) -> (i32, i32) {
    %c0_i32 = arith.constant 0 : i32
    %c0_i32_0 = arith.constant 0 : i32
    %c0_i32_1 = arith.constant 0 : i32
    return %c0_i32, %c0_i32_0 : i32, i32
  }
  func.func @transform_4(%arg0: i32) -> (i32, i32) {
    %c0_i32 = arith.constant 0 : i32
    %c0_i32_0 = arith.constant 0 : i32
    %c0_i32_1 = arith.constant 0 : i32
    return %c0_i32, %c0_i32_0 : i32, i32
  }
  func.func @transform_5(%arg0: i32) -> (i32, i32) {
    %c0_i32 = arith.constant 0 : i32
    %c0_i32_0 = arith.constant 0 : i32
    %c0_i32_1 = arith.constant 0 : i32
    return %c0_i32, %c0_i32_0 : i32, i32
  }
  func.func @transform_6(%arg0: i32) -> (i32, i32) {
    %c0_i32 = arith.constant 0 : i32
    %c0_i32_0 = arith.constant 0 : i32
    %c0_i32_1 = arith.constant 0 : i32
    return %c0_i32, %c0_i32_0 : i32, i32
  }
  func.func @transform_7(%arg0: i32) -> (i32, i32) {
    %c0_i32 = arith.constant 0 : i32
    %c0_i32_0 = arith.constant 0 : i32
    %c0_i32_1 = arith.constant 0 : i32
    return %c0_i32, %c0_i32_0 : i32, i32
  }
  func.func @transform_8(%arg0: i32) -> (i32, i32) {
    %c0_i32 = arith.constant 0 : i32
    %c0_i32_0 = arith.constant 0 : i32
    %c0_i32_1 = arith.constant 0 : i32
    return %c0_i32, %c0_i32_0 : i32, i32
  }
  func.func @transform_9(%arg0: i32) -> (i32, i32) {
    %c0_i32 = arith.constant 0 : i32
    %c0_i32_0 = arith.constant 0 : i32
    %c0_i32_1 = arith.constant 0 : i32
    return %c0_i32, %c0_i32_0 : i32, i32
  }
  func.func @transform_10(%arg0: i32) -> (i32, i32) {
    %c0_i32 = arith.constant 0 : i32
    %c0_i32_0 = arith.constant 0 : i32
    return %arg0, %c0_i32 : i32, i32
  }
}

</mosaic_0001>

<llo_original>
// kernel: geo_regressor_forward.1
$region0: #{geo_regressor_forward.1}
  #allocation0 [shape = 'u32[]', space=smem, size = 0x4, offset = 0x4, fixed_abs, tag = 'smem constant byte address 0x4 - core index']
  #allocation1 [shape = 'u32[72,128]{1,0:T(1,128)}', space=vmem, size = 0x9000, scoped, tag = 'internal scratch']
  %s0 = inlined_call_operand.vmem [shape: bf16[4096,32], index: 0, kind: input, shape index: {}]
  %s1 = inlined_call_operand.vmem [shape: f32[16,128], index: 1, kind: input, shape index: {}]
  %s2 = inlined_call_operand.vmem [shape: bf16[32,128], index: 2, kind: input, shape index: {}]
  %s3 = inlined_call_operand.vmem [shape: f32[1,128], index: 3, kind: input, shape index: {}]
  %s4 = inlined_call_operand.vmem [shape: bf16[128,256], index: 4, kind: input, shape index: {}]
  %s5 = inlined_call_operand.vmem [shape: f32[1,256], index: 5, kind: input, shape index: {}]
  %s6 = inlined_call_operand.vmem [shape: bf16[256,128], index: 6, kind: input, shape index: {}]
  %s7 = inlined_call_operand.vmem [shape: f32[1,128], index: 7, kind: input, shape index: {}]
  %s8 = inlined_call_operand.vmem [shape: bf16[128,128], index: 8, kind: input, shape index: {}]
  %s9 = inlined_call_operand.vmem [shape: f32[1,128], index: 9, kind: input, shape index: {}]
  %s10 = inlined_call_operand.vmem [shape: f32[16,128], index: 10, kind: output, shape index: {}]
  %s11 = sld [smem:[#allocation0]]
  $region73: #{geo_regressor_forward.1} parent=0
    _
  %s13 = ssub.s32 1, %s11
  %s14 = scalar_select 0, %s13, %s11
  loop: start=0, step=1, limit=4
  $region2: #{geo_regressor_forward.1} parent=0 // loop_pre_header
    _
  $region3: #{geo_regressor_forward.1} parent=0 // loop_header
    %s16 = sphi 0, %s20
    %p17 = scmp.ge.s32.totalorder %s16, 4
    %s26 = sphi 0, %s28
    %s29 = sphi 0, %s26
    %s30 = sphi 0, %s29
    %s46 = sphi 0, %s30
    %s52 = sphi 0, %s54
    %s55 = sphi 0, %s52
    %s56 = sphi 0, %s55
    %s72 = sphi 0, %s56
    %s76 = sphi 0, %s76
    %s78 = sphi 0, %s76
    %s79 = sphi 0, %s78
    %s93 = sphi 0, %s79
    %s97 = sphi 0, %s97
    %s99 = sphi 0, %s97
    %s100 = sphi 0, %s99
    %s114 = sphi 0, %s100
    %s118 = sphi 0, %s118
    %s120 = sphi 0, %s118
    %s121 = sphi 0, %s120
    %s135 = sphi 0, %s121
    %s139 = sphi 0, %s139
    %s141 = sphi 0, %s139
    %s142 = sphi 0, %s141
    %s156 = sphi 0, %s142
    %s160 = sphi 0, %s160
    %s162 = sphi 0, %s160
    %s163 = sphi 0, %s162
    %s177 = sphi 0, %s163
    %s181 = sphi 0, %s181
    %s183 = sphi 0, %s181
    %s184 = sphi 0, %s183
    %s198 = sphi 0, %s184
    %s202 = sphi 0, %s202
    %s204 = sphi 0, %s202
    %s205 = sphi 0, %s204
    %s219 = sphi 0, %s205
    %s223 = sphi 0, %s223
    %s225 = sphi 0, %s223
    %s226 = sphi 0, %s225
    %s240 = sphi 0, %s226
    %s246 = sphi 0, %s248
    %s249 = sphi 0, %s246
    %s250 = sphi 0, %s249
    %s266 = sphi 0, %s250
  $region4: #{geo_regressor_forward.1} parent=0 // loop_header_branch
    %19 = sbr.rel (%p17) target = $region8
  $region5: #{geo_regressor_forward.1} parent=0 // loop_body
    %s21 = ssub.s32 %s16, 1
    %s22 = ssub.s32 %s16, 2
    %s23 = sadd.s32 %s16, 1
    %s24 = ssub.s32 %s16, %s23
    %p25 = scmp.eq.s32.totalorder %s24, 0
    %s27 = sadd.s32 %s26, 1
    %s28 = scalar_select %p25, %s26, %s27
    %p31 = pneg %p25
    %p32 = scmp.eq.s32.totalorder %s16, 1
    %p33 = por %p31, %p32
    %p34 = scmp.ne.s32.totalorder %s26, %s29
    %p35 = scmp.eq.s32.totalorder %s16, 0
    %p36 = por %p34, %p35
    %p37 = scmp.ne.s32.totalorder %s26, %s29
    %p38 = scmp.eq.s32.totalorder %s21, 1
    %p39 = por %p37, %p38
    %p40 = scmp.ne.s32.totalorder %s29, %s30
    %p41 = scmp.eq.s32.totalorder %s21, 0
    %p42 = por %p40, %p41
    %p43 = scmp.ne.s32.totalorder %s29, %s30
    %p44 = scmp.eq.s32.totalorder %s22, 1
    %p45 = por %p43, %p44
    %p47 = scmp.ne.s32.totalorder %s30, %s46
    %p48 = scmp.eq.s32.totalorder %s22, 0
    %p49 = por %p47, %p48
    %s50 = ssub.s32 %s16, %s23
    %p51 = scmp.eq.s32.totalorder %s50, 0
    %s53 = sadd.s32 %s52, 1
    %s54 = scalar_select %p51, %s52, %s53
    %p57 = pneg %p51
    %p58 = scmp.eq.s32.totalorder %s16, 1
    %p59 = por %p57, %p58
    %p60 = scmp.ne.s32.totalorder %s52, %s55
    %p61 = scmp.eq.s32.totalorder %s16, 0
    %p62 = por %p60, %p61
    %p63 = scmp.ne.s32.totalorder %s52, %s55
    %p64 = scmp.eq.s32.totalorder %s21, 1
    %p65 = por %p63, %p64
    %p66 = scmp.ne.s32.totalorder %s55, %s56
    %p67 = scmp.eq.s32.totalorder %s21, 0
    %p68 = por %p66, %p67
    %p69 = scmp.ne.s32.totalorder %s55, %s56
    %p70 = scmp.eq.s32.totalorder %s22, 1
    %p71 = por %p69, %p70
    %p73 = scmp.ne.s32.totalorder %s56, %s72
    %p74 = scmp.eq.s32.totalorder %s22, 0
    %p75 = por %p73, %p74
    %s77 = sadd.s32 %s76, 1
    %p80 = scmp.eq.s32.totalorder %s16, 1
    %p81 = scmp.ne.s32.totalorder %s76, %s78
    %p82 = scmp.eq.s32.totalorder %s16, 0
    %p83 = por %p81, %p82
    %p84 = scmp.ne.s32.totalorder %s76, %s78
    %p85 = scmp.eq.s32.totalorder %s21, 1
    %p86 = por %p84, %p85
    %p87 = scmp.ne.s32.totalorder %s78, %s79
    %p88 = scmp.eq.s32.totalorder %s21, 0
    %p89 = por %p87, %p88
    %p90 = scmp.ne.s32.totalorder %s78, %s79
    %p91 = scmp.eq.s32.totalorder %s22, 1
    %p92 = por %p90, %p91
    %p94 = scmp.ne.s32.totalorder %s79, %s93
    %p95 = scmp.eq.s32.totalorder %s22, 0
    %p96 = por %p94, %p95
    %s98 = sadd.s32 %s97, 1
    %p101 = scmp.eq.s32.totalorder %s16, 1
    %p102 = scmp.ne.s32.totalorder %s97, %s99
    %p103 = scmp.eq.s32.totalorder %s16, 0
    %p104 = por %p102, %p103
    %p105 = scmp.ne.s32.totalorder %s97, %s99
    %p106 = scmp.eq.s32.totalorder %s21, 1
    %p107 = por %p105, %p106
    %p108 = scmp.ne.s32.totalorder %s99, %s100
    %p109 = scmp.eq.s32.totalorder %s21, 0
    %p110 = por %p108, %p109
    %p111 = scmp.ne.s32.totalorder %s99, %s100
    %p112 = scmp.eq.s32.totalorder %s22, 1
    %p113 = por %p111, %p112
    %p115 = scmp.ne.s32.totalorder %s100, %s114
    %p116 = scmp.eq.s32.totalorder %s22, 0
    %p117 = por %p115, %p116
    %s119 = sadd.s32 %s118, 1
    %p122 = scmp.eq.s32.totalorder %s16, 1
    %p123 = scmp.ne.s32.totalorder %s118, %s120
    %p124 = scmp.eq.s32.totalorder %s16, 0
    %p125 = por %p123, %p124
    %p126 = scmp.ne.s32.totalorder %s118, %s120
    %p127 = scmp.eq.s32.totalorder %s21, 1
    %p128 = por %p126, %p127
    %p129 = scmp.ne.s32.totalorder %s120, %s121
    %p130 = scmp.eq.s32.totalorder %s21, 0
    %p131 = por %p129, %p130
    %p132 = scmp.ne.s32.totalorder %s120, %s121
    %p133 = scmp.eq.s32.totalorder %s22, 1
    %p134 = por %p132, %p133
    %p136 = scmp.ne.s32.totalorder %s121, %s135
    %p137 = scmp.eq.s32.totalorder %s22, 0
    %p138 = por %p136, %p137
    %s140 = sadd.s32 %s139, 1
    %p143 = scmp.eq.s32.totalorder %s16, 1
    %p144 = scmp.ne.s32.totalorder %s139, %s141
    %p145 = scmp.eq.s32.totalorder %s16, 0
    %p146 = por %p144, %p145
    %p147 = scmp.ne.s32.totalorder %s139, %s141
    %p148 = scmp.eq.s32.totalorder %s21, 1
    %p149 = por %p147, %p148
    %p150 = scmp.ne.s32.totalorder %s141, %s142
    %p151 = scmp.eq.s32.totalorder %s21, 0
    %p152 = por %p150, %p151
    %p153 = scmp.ne.s32.totalorder %s141, %s142
    %p154 = scmp.eq.s32.totalorder %s22, 1
    %p155 = por %p153, %p154
    %p157 = scmp.ne.s32.totalorder %s142, %s156
    %p158 = scmp.eq.s32.totalorder %s22, 0
    %p159 = por %p157, %p158
    %s161 = sadd.s32 %s160, 1
    %p164 = scmp.eq.s32.totalorder %s16, 1
    %p165 = scmp.ne.s32.totalorder %s160, %s162
    %p166 = scmp.eq.s32.totalorder %s16, 0
    %p167 = por %p165, %p166
    %p168 = scmp.ne.s32.totalorder %s160, %s162
    %p169 = scmp.eq.s32.totalorder %s21, 1
    %p170 = por %p168, %p169
    %p171 = scmp.ne.s32.totalorder %s162, %s163
    %p172 = scmp.eq.s32.totalorder %s21, 0
    %p173 = por %p171, %p172
    %p174 = scmp.ne.s32.totalorder %s162, %s163
    %p175 = scmp.eq.s32.totalorder %s22, 1
    %p176 = por %p174, %p175
    %p178 = scmp.ne.s32.totalorder %s163, %s177
    %p179 = scmp.eq.s32.totalorder %s22, 0
    %p180 = por %p178, %p179
    %s182 = sadd.s32 %s181, 1
    %p185 = scmp.eq.s32.totalorder %s16, 1
    %p186 = scmp.ne.s32.totalorder %s181, %s183
    %p187 = scmp.eq.s32.totalorder %s16, 0
    %p188 = por %p186, %p187
    %p189 = scmp.ne.s32.totalorder %s181, %s183
    %p190 = scmp.eq.s32.totalorder %s21, 1
    %p191 = por %p189, %p190
    %p192 = scmp.ne.s32.totalorder %s183, %s184
    %p193 = scmp.eq.s32.totalorder %s21, 0
    %p194 = por %p192, %p193
    %p195 = scmp.ne.s32.totalorder %s183, %s184
    %p196 = scmp.eq.s32.totalorder %s22, 1
    %p197 = por %p195, %p196
    %p199 = scmp.ne.s32.totalorder %s184, %s198
    %p200 = scmp.eq.s32.totalorder %s22, 0
    %p201 = por %p199, %p200
    %s203 = sadd.s32 %s202, 1
    %p206 = scmp.eq.s32.totalorder %s16, 1
    %p207 = scmp.ne.s32.totalorder %s202, %s204
    %p208 = scmp.eq.s32.totalorder %s16, 0
    %p209 = por %p207, %p208
    %p210 = scmp.ne.s32.totalorder %s202, %s204
    %p211 = scmp.eq.s32.totalorder %s21, 1
    %p212 = por %p210, %p211
    %p213 = scmp.ne.s32.totalorder %s204, %s205
    %p214 = scmp.eq.s32.totalorder %s21, 0
    %p215 = por %p213, %p214
    %p216 = scmp.ne.s32.totalorder %s204, %s205
    %p217 = scmp.eq.s32.totalorder %s22, 1
    %p218 = por %p216, %p217
    %p220 = scmp.ne.s32.totalorder %s205, %s219
    %p221 = scmp.eq.s32.totalorder %s22, 0
    %p222 = por %p220, %p221
    %s224 = sadd.s32 %s223, 1
    %p227 = scmp.eq.s32.totalorder %s16, 1
    %p228 = scmp.ne.s32.totalorder %s223, %s225
    %p229 = scmp.eq.s32.totalorder %s16, 0
    %p230 = por %p228, %p229
    %p231 = scmp.ne.s32.totalorder %s223, %s225
    %p232 = scmp.eq.s32.totalorder %s21, 1
    %p233 = por %p231, %p232
    %p234 = scmp.ne.s32.totalorder %s225, %s226
    %p235 = scmp.eq.s32.totalorder %s21, 0
    %p236 = por %p234, %p235
    %p237 = scmp.ne.s32.totalorder %s225, %s226
    %p238 = scmp.eq.s32.totalorder %s22, 1
    %p239 = por %p237, %p238
    %p241 = scmp.ne.s32.totalorder %s226, %s240
    %p242 = scmp.eq.s32.totalorder %s22, 0
    %p243 = por %p241, %p242
    %s244 = ssub.s32 %s16, %s23
    %p245 = scmp.eq.s32.totalorder %s244, 0
    %s247 = sadd.s32 %s246, 1
    %s248 = scalar_select %p245, %s246, %s247
    %p251 = pneg %p245
    %p252 = scmp.eq.s32.totalorder %s16, 1
    %p253 = por %p251, %p252
    %p254 = scmp.ne.s32.totalorder %s246, %s249
    %p255 = scmp.eq.s32.totalorder %s16, 0
    %p256 = por %p254, %p255
    %p257 = scmp.ne.s32.totalorder %s246, %s249
    %p258 = scmp.eq.s32.totalorder %s21, 1
    %p259 = por %p257, %p258
    %p260 = scmp.ne.s32.totalorder %s249, %s250
    %p261 = scmp.eq.s32.totalorder %s21, 0
    %p262 = por %p260, %p261
    %p263 = scmp.ne.s32.totalorder %s249, %s250
    %p264 = scmp.eq.s32.totalorder %s22, 1
    %p265 = por %p263, %p264
    %p267 = scmp.ne.s32.totalorder %s250, %s266
    %p268 = scmp.eq.s32.totalorder %s22, 0
    %p269 = por %p267, %p268
    %p270 = scmp.le.s32.totalorder 1, %s16
    %p271 = scmp.lt.s32.totalorder %s16, 3
    %p272 = pnand %p270, %p271
    %p273 = pneg %p272
    // Predicated region
    $region9: #{geo_regressor_forward.1} parent=5 // pred_check
      _
    $region10: #{geo_regressor_forward.1} parent=5 // pred_check_branch
      %275 = sbr.rel (%p272) target = $region12
    $region11: #{geo_regressor_forward.1} parent=5 // pred_region
      %s276 = ssub.s32 %s16, 1
      // Predicated region
      $region13: #{geo_regressor_forward.1} parent=11 // pred_check
        %p277 = pneg %p89
      $region14: #{geo_regressor_forward.1} parent=11 // pred_check_branch
        %279 = sbr.rel (%p277) target = $region16
      $region15: #{geo_regressor_forward.1} parent=11 // pred_region
        _
      $region16: #{geo_regressor_forward.1} parent=11 // pred_fallthru
        _
      // Predicated region
      $region17: #{geo_regressor_forward.1} parent=11 // pred_check
        %p280 = pneg %p110
      $region18: #{geo_regressor_forward.1} parent=11 // pred_check_branch
        %282 = sbr.rel (%p280) target = $region20
      $region19: #{geo_regressor_forward.1} parent=11 // pred_region
        _
      $region20: #{geo_regressor_forward.1} parent=11 // pred_fallthru
        _
      // Predicated region
      $region21: #{geo_regressor_forward.1} parent=11 // pred_check
        %p283 = pneg %p131
      $region22: #{geo_regressor_forward.1} parent=11 // pred_check_branch
        %285 = sbr.rel (%p283) target = $region24
      $region23: #{geo_regressor_forward.1} parent=11 // pred_region
        _
      $region24: #{geo_regressor_forward.1} parent=11 // pred_fallthru
        _
      // Predicated region
      $region25: #{geo_regressor_forward.1} parent=11 // pred_check
        %p286 = pneg %p152
      $region26: #{geo_regressor_forward.1} parent=11 // pred_check_branch
        %288 = sbr.rel (%p286) target = $region28
      $region27: #{geo_regressor_forward.1} parent=11 // pred_region
        _
      $region28: #{geo_regressor_forward.1} parent=11 // pred_fallthru
        _
      // Predicated region
      $region29: #{geo_regressor_forward.1} parent=11 // pred_check
        %p289 = pneg %p173
      $region30: #{geo_regressor_forward.1} parent=11 // pred_check_branch
        %291 = sbr.rel (%p289) target = $region32
      $region31: #{geo_regressor_forward.1} parent=11 // pred_region
        _
      $region32: #{geo_regressor_forward.1} parent=11 // pred_fallthru
        _
      // Predicated region
      $region33: #{geo_regressor_forward.1} parent=11 // pred_check
        %p292 = pneg %p194
      $region34: #{geo_regressor_forward.1} parent=11 // pred_check_branch
        %294 = sbr.rel (%p292) target = $region36
      $region35: #{geo_regressor_forward.1} parent=11 // pred_region
        _
      $region36: #{geo_regressor_forward.1} parent=11 // pred_fallthru
        _
      // Predicated region
      $region37: #{geo_regressor_forward.1} parent=11 // pred_check
        %p295 = pneg %p215
      $region38: #{geo_regressor_forward.1} parent=11 // pred_check_branch
        %297 = sbr.rel (%p295) target = $region40
      $region39: #{geo_regressor_forward.1} parent=11 // pred_region
        _
      $region40: #{geo_regressor_forward.1} parent=11 // pred_fallthru
        _
      // Predicated region
      $region41: #{geo_regressor_forward.1} parent=11 // pred_check
        %p298 = pneg %p236
      $region42: #{geo_regressor_forward.1} parent=11 // pred_check_branch
        %300 = sbr.rel (%p298) target = $region44
      $region43: #{geo_regressor_forward.1} parent=11 // pred_region
        _
      $region44: #{geo_regressor_forward.1} parent=11 // pred_fallthru
        _
    $region12: #{geo_regressor_forward.1} parent=5 // pred_fallthru
      _
    %p301 = scmp.lt.s32.totalorder %s16, 2
    // Predicated region
    $region45: #{geo_regressor_forward.1} parent=5 // pred_check
      %p302 = pneg %p301
    $region46: #{geo_regressor_forward.1} parent=5 // pred_check_branch
      %304 = sbr.rel (%p302) target = $region48
    $region47: #{geo_regressor_forward.1} parent=5 // pred_region
      // Predicated region
      $region49: #{geo_regressor_forward.1} parent=47 // pred_check
        %p305 = pneg %p36
      $region50: #{geo_regressor_forward.1} parent=47 // pred_check_branch
        %307 = sbr.rel (%p305) target = $region52
      $region51: #{geo_regressor_forward.1} parent=47 // pred_region
        %s308 = smul.u32 256, %s16
        %p309 = scmp.lt.s32.totalorder %s308, 511
        %s310 = scalar_select %p309, %s308, 511
        %s311 = smul.addr %s310, 4
        %s312 = scalar_lea.vmem %s0, %s311
        %s313 = smul.u32 256, %s16
      $region52: #{geo_regressor_forward.1} parent=47 // pred_fallthru
        _
      // Predicated region
      $region53: #{geo_regressor_forward.1} parent=47 // pred_check
        %p314 = pneg %p62
      $region54: #{geo_regressor_forward.1} parent=47 // pred_check_branch
        %316 = sbr.rel (%p314) target = $region56
      $region55: #{geo_regressor_forward.1} parent=47 // pred_region
        %p317 = scmp.lt.s32.totalorder %s16, 1
        %s318 = scalar_select %p317, %s16, 1
        %s319 = smul.addr %s318, 8
        %s320 = scalar_lea.vmem %s1, %s319
      $region56: #{geo_regressor_forward.1} parent=47 // pred_fallthru
        _
    $region48: #{geo_regressor_forward.1} parent=5 // pred_fallthru
      _
    %p321 = scmp.le.s32.totalorder 1, %s16
    %p322 = scmp.lt.s32.totalorder %s16, 3
    %p323 = pnand %p321, %p322
    %p324 = pneg %p323
    // Predicated region
    $region57: #{geo_regressor_forward.1} parent=5 // pred_check
      _
    $region58: #{geo_regressor_forward.1} parent=5 // pred_check_branch
      %326 = sbr.rel (%p323) target = $region60
    $region59: #{geo_regressor_forward.1} parent=5 // pred_region
      %s327 = ssub.s32 %s16, 1
      %s328 = smul.u32 256, %s21
      %p329 = scmp.lt.s32.totalorder %s328, 511
      %s330 = scalar_select %p329, %s328, 511
      %s331 = smul.addr %s330, 4
      %s332 = scalar_lea.vmem %s0, %s331
      %p333 = pneg %p42
      %p334 = pneg %p39
      %p335 = scmp.lt.s32.totalorder %s21, 1
      %s336 = scalar_select %p335, %s21, 1
      %s337 = smul.addr %s336, 8
      %s338 = scalar_lea.vmem %s1, %s337
      %p339 = pneg %p68
      %p340 = pneg %p65
      %p341 = pneg %p89
      %p342 = pneg %p86
      %p343 = pneg %p110
      %p344 = pneg %p107
      %p345 = pneg %p131
      %p346 = pneg %p128
      %p347 = pneg %p152
      %p348 = pneg %p149
      %p349 = pneg %p173
      %p350 = pneg %p170
      %p351 = pneg %p194
      %p352 = pneg %p191
      %p353 = pneg %p215
      %p354 = pneg %p212
      %p355 = pneg %p236
      %p356 = pneg %p233
      %p357 = pneg %p262
      %p358 = pneg %p259
      %p359 = scmp.lt.s32.totalorder %s21, 1
      %s360 = scalar_select %p359, %s21, 1
      %s361 = smul.addr %s360, 8
      %s362 = scalar_lea.vmem %s10, %s361
      %s363 = smul.u32 256, %s21
      %p364 = scmp.lt.s32.totalorder %s363, 511
      %s365 = scalar_select %p364, %s363, 511
      %s366 = smul.addr %s365, 4
      %s367 = scalar_lea.vmem %s0, %s366
      %s368 = smul.u32 256, %s21
      %p369 = scmp.lt.s32.totalorder %s21, 1
      %s370 = scalar_select %p369, %s21, 1
      %s371 = smul.addr %s370, 8
      %s372 = scalar_lea.vmem %s1, %s371
      %p373 = scmp.lt.s32.totalorder %s21, 1
      %s374 = scalar_select %p373, %s21, 1
      %s375 = smul.addr %s374, 8
      %s376 = scalar_lea.vmem %s10, %s375
      %v378 = vld [vmem:[%s367] sm:$0xf]
      %v379 = vld [vmem:[%s367 + $0x4] sm:$0xf]
      %v380 = vld [vmem:[%s367 + $0x8] sm:$0xf]
      %v381 = vld [vmem:[%s367 + $0xc] sm:$0xf]
      %v382 = vld [vmem:[%s367 + $0x10] sm:$0xf]
      %v383 = vld [vmem:[%s367 + $0x14] sm:$0xf]
      %v384 = vld [vmem:[%s367 + $0x18] sm:$0xf]
      %v385 = vld [vmem:[%s367 + $0x1c] sm:$0xf]
      %v386 = vld [vmem:[%s367 + $0x20] sm:$0xf]
      %v387 = vld [vmem:[%s367 + $0x24] sm:$0xf]
      %v388 = vld [vmem:[%s367 + $0x28] sm:$0xf]
      %v389 = vld [vmem:[%s367 + $0x2c] sm:$0xf]
      %v390 = vld [vmem:[%s367 + $0x30] sm:$0xf]
      %v391 = vld [vmem:[%s367 + $0x34] sm:$0xf]
      %v392 = vld [vmem:[%s367 + $0x38] sm:$0xf]
      %v393 = vld [vmem:[%s367 + $0x3c] sm:$0xf]
      %v394 = vld [vmem:[%s367 + $0x40] sm:$0xf]
      %v395 = vld [vmem:[%s367 + $0x44] sm:$0xf]
      %v396 = vld [vmem:[%s367 + $0x48] sm:$0xf]
      %v397 = vld [vmem:[%s367 + $0x4c] sm:$0xf]
      %v398 = vld [vmem:[%s367 + $0x50] sm:$0xf]
      %v399 = vld [vmem:[%s367 + $0x54] sm:$0xf]
      %v400 = vld [vmem:[%s367 + $0x58] sm:$0xf]
      %v401 = vld [vmem:[%s367 + $0x5c] sm:$0xf]
      %v402 = vld [vmem:[%s367 + $0x60] sm:$0xf]
      %v403 = vld [vmem:[%s367 + $0x64] sm:$0xf]
      %v404 = vld [vmem:[%s367 + $0x68] sm:$0xf]
      %v405 = vld [vmem:[%s367 + $0x6c] sm:$0xf]
      %v406 = vld [vmem:[%s367 + $0x70] sm:$0xf]
      %v407 = vld [vmem:[%s367 + $0x74] sm:$0xf]
      %v408 = vld [vmem:[%s367 + $0x78] sm:$0xf]
      %v409 = vld [vmem:[%s367 + $0x7c] sm:$0xf]
      %v410 = vld [vmem:[%s367 + $0x80] sm:$0xf]
      %v411 = vld [vmem:[%s367 + $0x84] sm:$0xf]
      %v412 = vld [vmem:[%s367 + $0x88] sm:$0xf]
      %v413 = vld [vmem:[%s367 + $0x8c] sm:$0xf]
      %v414 = vld [vmem:[%s367 + $0x90] sm:$0xf]
      %v415 = vld [vmem:[%s367 + $0x94] sm:$0xf]
      %v416 = vld [vmem:[%s367 + $0x98] sm:$0xf]
      %v417 = vld [vmem:[%s367 + $0x9c] sm:$0xf]
      %v418 = vld [vmem:[%s367 + $0xa0] sm:$0xf]
      %v419 = vld [vmem:[%s367 + $0xa4] sm:$0xf]
      %v420 = vld [vmem:[%s367 + $0xa8] sm:$0xf]
      %v421 = vld [vmem:[%s367 + $0xac] sm:$0xf]
      %v422 = vld [vmem:[%s367 + $0xb0] sm:$0xf]
      %v423 = vld [vmem:[%s367 + $0xb4] sm:$0xf]
      %v424 = vld [vmem:[%s367 + $0xb8] sm:$0xf]
      %v425 = vld [vmem:[%s367 + $0xbc] sm:$0xf]
      %v426 = vld [vmem:[%s367 + $0xc0] sm:$0xf]
      %v427 = vld [vmem:[%s367 + $0xc4] sm:$0xf]
      %v428 = vld [vmem:[%s367 + $0xc8] sm:$0xf]
      %v429 = vld [vmem:[%s367 + $0xcc] sm:$0xf]
      %v430 = vld [vmem:[%s367 + $0xd0] sm:$0xf]
      %v431 = vld [vmem:[%s367 + $0xd4] sm:$0xf]
      %v432 = vld [vmem:[%s367 + $0xd8] sm:$0xf]
      %v433 = vld [vmem:[%s367 + $0xdc] sm:$0xf]
      %v434 = vld [vmem:[%s367 + $0xe0] sm:$0xf]
      %v435 = vld [vmem:[%s367 + $0xe4] sm:$0xf]
      %v436 = vld [vmem:[%s367 + $0xe8] sm:$0xf]
      %v437 = vld [vmem:[%s367 + $0xec] sm:$0xf]
      %v438 = vld [vmem:[%s367 + $0xf0] sm:$0xf]
      %v439 = vld [vmem:[%s367 + $0xf4] sm:$0xf]
      %v440 = vld [vmem:[%s367 + $0xf8] sm:$0xf]
      %v441 = vld [vmem:[%s367 + $0xfc] sm:$0xf]
      %v442 = vld [vmem:[%s367 + $0x100] sm:$0xf]
      %v443 = vld [vmem:[%s367 + $0x104] sm:$0xf]
      %v444 = vld [vmem:[%s367 + $0x108] sm:$0xf]
      %v445 = vld [vmem:[%s367 + $0x10c] sm:$0xf]
      %v446 = vld [vmem:[%s367 + $0x110] sm:$0xf]
      %v447 = vld [vmem:[%s367 + $0x114] sm:$0xf]
      %v448 = vld [vmem:[%s367 + $0x118] sm:$0xf]
      %v449 = vld [vmem:[%s367 + $0x11c] sm:$0xf]
      %v450 = vld [vmem:[%s367 + $0x120] sm:$0xf]
      %v451 = vld [vmem:[%s367 + $0x124] sm:$0xf]
      %v452 = vld [vmem:[%s367 + $0x128] sm:$0xf]
      %v453 = vld [vmem:[%s367 + $0x12c] sm:$0xf]
      %v454 = vld [vmem:[%s367 + $0x130] sm:$0xf]
      %v455 = vld [vmem:[%s367 + $0x134] sm:$0xf]
      %v456 = vld [vmem:[%s367 + $0x138] sm:$0xf]
      %v457 = vld [vmem:[%s367 + $0x13c] sm:$0xf]
      %v458 = vld [vmem:[%s367 + $0x140] sm:$0xf]
      %v459 = vld [vmem:[%s367 + $0x144] sm:$0xf]
      %v460 = vld [vmem:[%s367 + $0x148] sm:$0xf]
      %v461 = vld [vmem:[%s367 + $0x14c] sm:$0xf]
      %v462 = vld [vmem:[%s367 + $0x150] sm:$0xf]
      %v463 = vld [vmem:[%s367 + $0x154] sm:$0xf]
      %v464 = vld [vmem:[%s367 + $0x158] sm:$0xf]
      %v465 = vld [vmem:[%s367 + $0x15c] sm:$0xf]
      %v466 = vld [vmem:[%s367 + $0x160] sm:$0xf]
      %v467 = vld [vmem:[%s367 + $0x164] sm:$0xf]
      %v468 = vld [vmem:[%s367 + $0x168] sm:$0xf]
      %v469 = vld [vmem:[%s367 + $0x16c] sm:$0xf]
      %v470 = vld [vmem:[%s367 + $0x170] sm:$0xf]
      %v471 = vld [vmem:[%s367 + $0x174] sm:$0xf]
      %v472 = vld [vmem:[%s367 + $0x178] sm:$0xf]
      %v473 = vld [vmem:[%s367 + $0x17c] sm:$0xf]
      %v474 = vld [vmem:[%s367 + $0x180] sm:$0xf]
      %v475 = vld [vmem:[%s367 + $0x184] sm:$0xf]
      %v476 = vld [vmem:[%s367 + $0x188] sm:$0xf]
      %v477 = vld [vmem:[%s367 + $0x18c] sm:$0xf]
      %v478 = vld [vmem:[%s367 + $0x190] sm:$0xf]
      %v479 = vld [vmem:[%s367 + $0x194] sm:$0xf]
      %v480 = vld [vmem:[%s367 + $0x198] sm:$0xf]
      %v481 = vld [vmem:[%s367 + $0x19c] sm:$0xf]
      %v482 = vld [vmem:[%s367 + $0x1a0] sm:$0xf]
      %v483 = vld [vmem:[%s367 + $0x1a4] sm:$0xf]
      %v484 = vld [vmem:[%s367 + $0x1a8] sm:$0xf]
      %v485 = vld [vmem:[%s367 + $0x1ac] sm:$0xf]
      %v486 = vld [vmem:[%s367 + $0x1b0] sm:$0xf]
      %v487 = vld [vmem:[%s367 + $0x1b4] sm:$0xf]
      %v488 = vld [vmem:[%s367 + $0x1b8] sm:$0xf]
      %v489 = vld [vmem:[%s367 + $0x1bc] sm:$0xf]
      %v490 = vld [vmem:[%s367 + $0x1c0] sm:$0xf]
      %v491 = vld [vmem:[%s367 + $0x1c4] sm:$0xf]
      %v492 = vld [vmem:[%s367 + $0x1c8] sm:$0xf]
      %v493 = vld [vmem:[%s367 + $0x1cc] sm:$0xf]
      %v494 = vld [vmem:[%s367 + $0x1d0] sm:$0xf]
      %v495 = vld [vmem:[%s367 + $0x1d4] sm:$0xf]
      %v496 = vld [vmem:[%s367 + $0x1d8] sm:$0xf]
      %v497 = vld [vmem:[%s367 + $0x1dc] sm:$0xf]
      %v498 = vld [vmem:[%s367 + $0x1e0] sm:$0xf]
      %v499 = vld [vmem:[%s367 + $0x1e4] sm:$0xf]
      %v500 = vld [vmem:[%s367 + $0x1e8] sm:$0xf]
      %v501 = vld [vmem:[%s367 + $0x1ec] sm:$0xf]
      %v502 = vld [vmem:[%s367 + $0x1f0] sm:$0xf]
      %v503 = vld [vmem:[%s367 + $0x1f4] sm:$0xf]
      %v504 = vld [vmem:[%s367 + $0x1f8] sm:$0xf]
      %v505 = vld [vmem:[%s367 + $0x1fc] sm:$0xf]
      %v506 = vld [vmem:[%s367 + $0x200] sm:$0xf]
      %v507 = vld [vmem:[%s367 + $0x204] sm:$0xf]
      %v508 = vld [vmem:[%s367 + $0x208] sm:$0xf]
      %v509 = vld [vmem:[%s367 + $0x20c] sm:$0xf]
      %v510 = vld [vmem:[%s367 + $0x210] sm:$0xf]
      %v511 = vld [vmem:[%s367 + $0x214] sm:$0xf]
      %v512 = vld [vmem:[%s367 + $0x218] sm:$0xf]
      %v513 = vld [vmem:[%s367 + $0x21c] sm:$0xf]
      %v514 = vld [vmem:[%s367 + $0x220] sm:$0xf]
      %v515 = vld [vmem:[%s367 + $0x224] sm:$0xf]
      %v516 = vld [vmem:[%s367 + $0x228] sm:$0xf]
      %v517 = vld [vmem:[%s367 + $0x22c] sm:$0xf]
      %v518 = vld [vmem:[%s367 + $0x230] sm:$0xf]
      %v519 = vld [vmem:[%s367 + $0x234] sm:$0xf]
      %v520 = vld [vmem:[%s367 + $0x238] sm:$0xf]
      %v521 = vld [vmem:[%s367 + $0x23c] sm:$0xf]
      %v522 = vld [vmem:[%s367 + $0x240] sm:$0xf]
      %v523 = vld [vmem:[%s367 + $0x244] sm:$0xf]
      %v524 = vld [vmem:[%s367 + $0x248] sm:$0xf]
      %v525 = vld [vmem:[%s367 + $0x24c] sm:$0xf]
      %v526 = vld [vmem:[%s367 + $0x250] sm:$0xf]
      %v527 = vld [vmem:[%s367 + $0x254] sm:$0xf]
      %v528 = vld [vmem:[%s367 + $0x258] sm:$0xf]
      %v529 = vld [vmem:[%s367 + $0x25c] sm:$0xf]
      %v530 = vld [vmem:[%s367 + $0x260] sm:$0xf]
      %v531 = vld [vmem:[%s367 + $0x264] sm:$0xf]
      %v532 = vld [vmem:[%s367 + $0x268] sm:$0xf]
      %v533 = vld [vmem:[%s367 + $0x26c] sm:$0xf]
      %v534 = vld [vmem:[%s367 + $0x270] sm:$0xf]
      %v535 = vld [vmem:[%s367 + $0x274] sm:$0xf]
      %v536 = vld [vmem:[%s367 + $0x278] sm:$0xf]
      %v537 = vld [vmem:[%s367 + $0x27c] sm:$0xf]
      %v538 = vld [vmem:[%s367 + $0x280] sm:$0xf]
      %v539 = vld [vmem:[%s367 + $0x284] sm:$0xf]
      %v540 = vld [vmem:[%s367 + $0x288] sm:$0xf]
      %v541 = vld [vmem:[%s367 + $0x28c] sm:$0xf]
      %v542 = vld [vmem:[%s367 + $0x290] sm:$0xf]
      %v543 = vld [vmem:[%s367 + $0x294] sm:$0xf]
      %v544 = vld [vmem:[%s367 + $0x298] sm:$0xf]
      %v545 = vld [vmem:[%s367 + $0x29c] sm:$0xf]
      %v546 = vld [vmem:[%s367 + $0x2a0] sm:$0xf]
      %v547 = vld [vmem:[%s367 + $0x2a4] sm:$0xf]
      %v548 = vld [vmem:[%s367 + $0x2a8] sm:$0xf]
      %v549 = vld [vmem:[%s367 + $0x2ac] sm:$0xf]
      %v550 = vld [vmem:[%s367 + $0x2b0] sm:$0xf]
      %v551 = vld [vmem:[%s367 + $0x2b4] sm:$0xf]
      %v552 = vld [vmem:[%s367 + $0x2b8] sm:$0xf]
      %v553 = vld [vmem:[%s367 + $0x2bc] sm:$0xf]
      %v554 = vld [vmem:[%s367 + $0x2c0] sm:$0xf]
      %v555 = vld [vmem:[%s367 + $0x2c4] sm:$0xf]
      %v556 = vld [vmem:[%s367 + $0x2c8] sm:$0xf]
      %v557 = vld [vmem:[%s367 + $0x2cc] sm:$0xf]
      %v558 = vld [vmem:[%s367 + $0x2d0] sm:$0xf]
      %v559 = vld [vmem:[%s367 + $0x2d4] sm:$0xf]
      %v560 = vld [vmem:[%s367 + $0x2d8] sm:$0xf]
      %v561 = vld [vmem:[%s367 + $0x2dc] sm:$0xf]
      %v562 = vld [vmem:[%s367 + $0x2e0] sm:$0xf]
      %v563 = vld [vmem:[%s367 + $0x2e4] sm:$0xf]
      %v564 = vld [vmem:[%s367 + $0x2e8] sm:$0xf]
      %v565 = vld [vmem:[%s367 + $0x2ec] sm:$0xf]
      %v566 = vld [vmem:[%s367 + $0x2f0] sm:$0xf]
      %v567 = vld [vmem:[%s367 + $0x2f4] sm:$0xf]
      %v568 = vld [vmem:[%s367 + $0x2f8] sm:$0xf]
      %v569 = vld [vmem:[%s367 + $0x2fc] sm:$0xf]
      %v570 = vld [vmem:[%s367 + $0x300] sm:$0xf]
      %v571 = vld [vmem:[%s367 + $0x304] sm:$0xf]
      %v572 = vld [vmem:[%s367 + $0x308] sm:$0xf]
      %v573 = vld [vmem:[%s367 + $0x30c] sm:$0xf]
      %v574 = vld [vmem:[%s367 + $0x310] sm:$0xf]
      %v575 = vld [vmem:[%s367 + $0x314] sm:$0xf]
      %v576 = vld [vmem:[%s367 + $0x318] sm:$0xf]
      %v577 = vld [vmem:[%s367 + $0x31c] sm:$0xf]
      %v578 = vld [vmem:[%s367 + $0x320] sm:$0xf]
      %v579 = vld [vmem:[%s367 + $0x324] sm:$0xf]
      %v580 = vld [vmem:[%s367 + $0x328] sm:$0xf]
      %v581 = vld [vmem:[%s367 + $0x32c] sm:$0xf]
      %v582 = vld [vmem:[%s367 + $0x330] sm:$0xf]
      %v583 = vld [vmem:[%s367 + $0x334] sm:$0xf]
      %v584 = vld [vmem:[%s367 + $0x338] sm:$0xf]
      %v585 = vld [vmem:[%s367 + $0x33c] sm:$0xf]
      %v586 = vld [vmem:[%s367 + $0x340] sm:$0xf]
      %v587 = vld [vmem:[%s367 + $0x344] sm:$0xf]
      %v588 = vld [vmem:[%s367 + $0x348] sm:$0xf]
      %v589 = vld [vmem:[%s367 + $0x34c] sm:$0xf]
      %v590 = vld [vmem:[%s367 + $0x350] sm:$0xf]
      %v591 = vld [vmem:[%s367 + $0x354] sm:$0xf]
      %v592 = vld [vmem:[%s367 + $0x358] sm:$0xf]
      %v593 = vld [vmem:[%s367 + $0x35c] sm:$0xf]
      %v594 = vld [vmem:[%s367 + $0x360] sm:$0xf]
      %v595 = vld [vmem:[%s367 + $0x364] sm:$0xf]
      %v596 = vld [vmem:[%s367 + $0x368] sm:$0xf]
      %v597 = vld [vmem:[%s367 + $0x36c] sm:$0xf]
      %v598 = vld [vmem:[%s367 + $0x370] sm:$0xf]
      %v599 = vld [vmem:[%s367 + $0x374] sm:$0xf]
      %v600 = vld [vmem:[%s367 + $0x378] sm:$0xf]
      %v601 = vld [vmem:[%s367 + $0x37c] sm:$0xf]
      %v602 = vld [vmem:[%s367 + $0x380] sm:$0xf]
      %v603 = vld [vmem:[%s367 + $0x384] sm:$0xf]
      %v604 = vld [vmem:[%s367 + $0x388] sm:$0xf]
      %v605 = vld [vmem:[%s367 + $0x38c] sm:$0xf]
      %v606 = vld [vmem:[%s367 + $0x390] sm:$0xf]
      %v607 = vld [vmem:[%s367 + $0x394] sm:$0xf]
      %v608 = vld [vmem:[%s367 + $0x398] sm:$0xf]
      %v609 = vld [vmem:[%s367 + $0x39c] sm:$0xf]
      %v610 = vld [vmem:[%s367 + $0x3a0] sm:$0xf]
      %v611 = vld [vmem:[%s367 + $0x3a4] sm:$0xf]
      %v612 = vld [vmem:[%s367 + $0x3a8] sm:$0xf]
      %v613 = vld [vmem:[%s367 + $0x3ac] sm:$0xf]
      %v614 = vld [vmem:[%s367 + $0x3b0] sm:$0xf]
      %v615 = vld [vmem:[%s367 + $0x3b4] sm:$0xf]
      %v616 = vld [vmem:[%s367 + $0x3b8] sm:$0xf]
      %v617 = vld [vmem:[%s367 + $0x3bc] sm:$0xf]
      %v618 = vld [vmem:[%s367 + $0x3c0] sm:$0xf]
      %v619 = vld [vmem:[%s367 + $0x3c4] sm:$0xf]
      %v620 = vld [vmem:[%s367 + $0x3c8] sm:$0xf]
      %v621 = vld [vmem:[%s367 + $0x3cc] sm:$0xf]
      %v622 = vld [vmem:[%s367 + $0x3d0] sm:$0xf]
      %v623 = vld [vmem:[%s367 + $0x3d4] sm:$0xf]
      %v624 = vld [vmem:[%s367 + $0x3d8] sm:$0xf]
      %v625 = vld [vmem:[%s367 + $0x3dc] sm:$0xf]
      %v626 = vld [vmem:[%s367 + $0x3e0] sm:$0xf]
      %v627 = vld [vmem:[%s367 + $0x3e4] sm:$0xf]
      %v628 = vld [vmem:[%s367 + $0x3e8] sm:$0xf]
      %v629 = vld [vmem:[%s367 + $0x3ec] sm:$0xf]
      %v630 = vld [vmem:[%s367 + $0x3f0] sm:$0xf]
      %v631 = vld [vmem:[%s367 + $0x3f4] sm:$0xf]
      %v632 = vld [vmem:[%s367 + $0x3f8] sm:$0xf]
      %v633 = vld [vmem:[%s367 + $0x3fc] sm:$0xf]
      %v634 = vld [vmem:[%s2] sm:$0xf]
      %v635 = vld [vmem:[%s2 + $0x4] sm:$0xf]
      %v636 = vld [vmem:[%s2 + $0x8] sm:$0xf]
      %v637 = vld [vmem:[%s2 + $0xc] sm:$0xf]
      %v638 = vld [vmem:[%s3] sm:$0x1]
      %v640 = vperm.slane %v638, 0
      %v898 = vunpack.c.l.b16 %v378
      %v899 = vunpack.c.l.b16 %v379
      %v900 = vunpack.c.l.b16 %v380
      %v901 = vunpack.c.l.b16 %v381
      %v902 = vunpack.c.l.b16 %v382
      %v903 = vunpack.c.l.b16 %v383
      %v904 = vunpack.c.l.b16 %v384
      %v905 = vunpack.c.l.b16 %v385
      %v906 = vunpack.c.l.b16 %v386
      %v907 = vunpack.c.l.b16 %v387
      %v908 = vunpack.c.l.b16 %v388
      %v909 = vunpack.c.l.b16 %v389
      %v910 = vunpack.c.l.b16 %v390
      %v911 = vunpack.c.l.b16 %v391
      %v912 = vunpack.c.l.b16 %v392
      %v913 = vunpack.c.l.b16 %v393
      %v914 = vunpack.c.l.b16 %v394
      %v915 = vunpack.c.l.b16 %v395
      %v916 = vunpack.c.l.b16 %v396
      %v917 = vunpack.c.l.b16 %v397
      %v918 = vunpack.c.l.b16 %v398
      %v919 = vunpack.c.l.b16 %v399
      %v920 = vunpack.c.l.b16 %v400
      %v921 = vunpack.c.l.b16 %v401
      %v922 = vunpack.c.l.b16 %v402
      %v923 = vunpack.c.l.b16 %v403
      %v924 = vunpack.c.l.b16 %v404
      %v925 = vunpack.c.l.b16 %v405
      %v926 = vunpack.c.l.b16 %v406
      %v927 = vunpack.c.l.b16 %v407
      %v928 = vunpack.c.l.b16 %v408
      %v929 = vunpack.c.l.b16 %v409
      %v930 = vunpack.c.l.b16 %v410
      %v931 = vunpack.c.l.b16 %v411
      %v932 = vunpack.c.l.b16 %v412
      %v933 = vunpack.c.l.b16 %v413
      %v934 = vunpack.c.l.b16 %v414
      %v935 = vunpack.c.l.b16 %v415
      %v936 = vunpack.c.l.b16 %v416
      %v937 = vunpack.c.l.b16 %v417
      %v938 = vunpack.c.l.b16 %v418
      %v939 = vunpack.c.l.b16 %v419
      %v940 = vunpack.c.l.b16 %v420
      %v941 = vunpack.c.l.b16 %v421
      %v942 = vunpack.c.l.b16 %v422
      %v943 = vunpack.c.l.b16 %v423
      %v944 = vunpack.c.l.b16 %v424
      %v945 = vunpack.c.l.b16 %v425
      %v946 = vunpack.c.l.b16 %v426
      %v947 = vunpack.c.l.b16 %v427
      %v948 = vunpack.c.l.b16 %v428
      %v949 = vunpack.c.l.b16 %v429
      %v950 = vunpack.c.l.b16 %v430
      %v951 = vunpack.c.l.b16 %v431
      %v952 = vunpack.c.l.b16 %v432
      %v953 = vunpack.c.l.b16 %v433
      %v954 = vunpack.c.l.b16 %v434
      %v955 = vunpack.c.l.b16 %v435
      %v956 = vunpack.c.l.b16 %v436
      %v957 = vunpack.c.l.b16 %v437
      %v958 = vunpack.c.l.b16 %v438
      %v959 = vunpack.c.l.b16 %v439
      %v960 = vunpack.c.l.b16 %v440
      %v961 = vunpack.c.l.b16 %v441
      %v962 = vunpack.c.l.b16 %v442
      %v963 = vunpack.c.l.b16 %v443
      %v964 = vunpack.c.l.b16 %v444
      %v965 = vunpack.c.l.b16 %v445
      %v966 = vunpack.c.l.b16 %v446
      %v967 = vunpack.c.l.b16 %v447
      %v968 = vunpack.c.l.b16 %v448
      %v969 = vunpack.c.l.b16 %v449
      %v970 = vunpack.c.l.b16 %v450
      %v971 = vunpack.c.l.b16 %v451
      %v972 = vunpack.c.l.b16 %v452
      %v973 = vunpack.c.l.b16 %v453
      %v974 = vunpack.c.l.b16 %v454
      %v975 = vunpack.c.l.b16 %v455
      %v976 = vunpack.c.l.b16 %v456
      %v977 = vunpack.c.l.b16 %v457
      %v978 = vunpack.c.l.b16 %v458
      %v979 = vunpack.c.l.b16 %v459
      %v980 = vunpack.c.l.b16 %v460
      %v981 = vunpack.c.l.b16 %v461
      %v982 = vunpack.c.l.b16 %v462
      %v983 = vunpack.c.l.b16 %v463
      %v984 = vunpack.c.l.b16 %v464
      %v985 = vunpack.c.l.b16 %v465
      %v986 = vunpack.c.l.b16 %v466
      %v987 = vunpack.c.l.b16 %v467
      %v988 = vunpack.c.l.b16 %v468
      %v989 = vunpack.c.l.b16 %v469
      %v990 = vunpack.c.l.b16 %v470
      %v991 = vunpack.c.l.b16 %v471
      %v992 = vunpack.c.l.b16 %v472
      %v993 = vunpack.c.l.b16 %v473
      %v994 = vunpack.c.l.b16 %v474
      %v995 = vunpack.c.l.b16 %v475
      %v996 = vunpack.c.l.b16 %v476
      %v997 = vunpack.c.l.b16 %v477
      %v998 = vunpack.c.l.b16 %v478
      %v999 = vunpack.c.l.b16 %v479
      %v1000 = vunpack.c.l.b16 %v480
      %v1001 = vunpack.c.l.b16 %v481
      %v1002 = vunpack.c.l.b16 %v482
      %v1003 = vunpack.c.l.b16 %v483
      %v1004 = vunpack.c.l.b16 %v484
      %v1005 = vunpack.c.l.b16 %v485
      %v1006 = vunpack.c.l.b16 %v486
      %v1007 = vunpack.c.l.b16 %v487
      %v1008 = vunpack.c.l.b16 %v488
      %v1009 = vunpack.c.l.b16 %v489
      %v1010 = vunpack.c.l.b16 %v490
      %v1011 = vunpack.c.l.b16 %v491
      %v1012 = vunpack.c.l.b16 %v492
      %v1013 = vunpack.c.l.b16 %v493
      %v1014 = vunpack.c.l.b16 %v494
      %v1015 = vunpack.c.l.b16 %v495
      %v1016 = vunpack.c.l.b16 %v496
      %v1017 = vunpack.c.l.b16 %v497
      %v1018 = vunpack.c.l.b16 %v498
      %v1019 = vunpack.c.l.b16 %v499
      %v1020 = vunpack.c.l.b16 %v500
      %v1021 = vunpack.c.l.b16 %v501
      %v1022 = vunpack.c.l.b16 %v502
      %v1023 = vunpack.c.l.b16 %v503
      %v1024 = vunpack.c.l.b16 %v504
      %v1025 = vunpack.c.l.b16 %v505
      %v1026 = vunpack.c.l.b16 %v506
      %v1027 = vunpack.c.l.b16 %v507
      %v1028 = vunpack.c.l.b16 %v508
      %v1029 = vunpack.c.l.b16 %v509
      %v1030 = vunpack.c.l.b16 %v510
      %v1031 = vunpack.c.l.b16 %v511
      %v1032 = vunpack.c.l.b16 %v512
      %v1033 = vunpack.c.l.b16 %v513
      %v1034 = vunpack.c.l.b16 %v514
      %v1035 = vunpack.c.l.b16 %v515
      %v1036 = vunpack.c.l.b16 %v516
      %v1037 = vunpack.c.l.b16 %v517
      %v1038 = vunpack.c.l.b16 %v518
      %v1039 = vunpack.c.l.b16 %v519
      %v1040 = vunpack.c.l.b16 %v520
      %v1041 = vunpack.c.l.b16 %v521
      %v1042 = vunpack.c.l.b16 %v522
      %v1043 = vunpack.c.l.b16 %v523
      %v1044 = vunpack.c.l.b16 %v524
      %v1045 = vunpack.c.l.b16 %v525
      %v1046 = vunpack.c.l.b16 %v526
      %v1047 = vunpack.c.l.b16 %v527
      %v1048 = vunpack.c.l.b16 %v528
      %v1049 = vunpack.c.l.b16 %v529
      %v1050 = vunpack.c.l.b16 %v530
      %v1051 = vunpack.c.l.b16 %v531
      %v1052 = vunpack.c.l.b16 %v532
      %v1053 = vunpack.c.l.b16 %v533
      %v1054 = vunpack.c.l.b16 %v534
      %v1055 = vunpack.c.l.b16 %v535
      %v1056 = vunpack.c.l.b16 %v536
      %v1057 = vunpack.c.l.b16 %v537
      %v1058 = vunpack.c.l.b16 %v538
      %v1059 = vunpack.c.l.b16 %v539
      %v1060 = vunpack.c.l.b16 %v540
      %v1061 = vunpack.c.l.b16 %v541
      %v1062 = vunpack.c.l.b16 %v542
      %v1063 = vunpack.c.l.b16 %v543
      %v1064 = vunpack.c.l.b16 %v544
      %v1065 = vunpack.c.l.b16 %v545
      %v1066 = vunpack.c.l.b16 %v546
      %v1067 = vunpack.c.l.b16 %v547
      %v1068 = vunpack.c.l.b16 %v548
      %v1069 = vunpack.c.l.b16 %v549
      %v1070 = vunpack.c.l.b16 %v550
      %v1071 = vunpack.c.l.b16 %v551
      %v1072 = vunpack.c.l.b16 %v552
      %v1073 = vunpack.c.l.b16 %v553
      %v1074 = vunpack.c.l.b16 %v554
      %v1075 = vunpack.c.l.b16 %v555
      %v1076 = vunpack.c.l.b16 %v556
      %v1077 = vunpack.c.l.b16 %v557
      %v1078 = vunpack.c.l.b16 %v558
      %v1079 = vunpack.c.l.b16 %v559
      %v1080 = vunpack.c.l.b16 %v560
      %v1081 = vunpack.c.l.b16 %v561
      %v1082 = vunpack.c.l.b16 %v562
      %v1083 = vunpack.c.l.b16 %v563
      %v1084 = vunpack.c.l.b16 %v564
      %v1085 = vunpack.c.l.b16 %v565
      %v1086 = vunpack.c.l.b16 %v566
      %v1087 = vunpack.c.l.b16 %v567
      %v1088 = vunpack.c.l.b16 %v568
      %v1089 = vunpack.c.l.b16 %v569
      %v1090 = vunpack.c.l.b16 %v570
      %v1091 = vunpack.c.l.b16 %v571
      %v1092 = vunpack.c.l.b16 %v572
      %v1093 = vunpack.c.l.b16 %v573
      %v1094 = vunpack.c.l.b16 %v574
      %v1095 = vunpack.c.l.b16 %v575
      %v1096 = vunpack.c.l.b16 %v576
      %v1097 = vunpack.c.l.b16 %v577
      %v1098 = vunpack.c.l.b16 %v578
      %v1099 = vunpack.c.l.b16 %v579
      %v1100 = vunpack.c.l.b16 %v580
      %v1101 = vunpack.c.l.b16 %v581
      %v1102 = vunpack.c.l.b16 %v582
      %v1103 = vunpack.c.l.b16 %v583
      %v1104 = vunpack.c.l.b16 %v584
      %v1105 = vunpack.c.l.b16 %v585
      %v1106 = vunpack.c.l.b16 %v586
      %v1107 = vunpack.c.l.b16 %v587
      %v1108 = vunpack.c.l.b16 %v588
      %v1109 = vunpack.c.l.b16 %v589
      %v1110 = vunpack.c.l.b16 %v590
      %v1111 = vunpack.c.l.b16 %v591
      %v1112 = vunpack.c.l.b16 %v592
      %v1113 = vunpack.c.l.b16 %v593
      %v1114 = vunpack.c.l.b16 %v594
      %v1115 = vunpack.c.l.b16 %v595
      %v1116 = vunpack.c.l.b16 %v596
      %v1117 = vunpack.c.l.b16 %v597
      %v1118 = vunpack.c.l.b16 %v598
      %v1119 = vunpack.c.l.b16 %v599
      %v1120 = vunpack.c.l.b16 %v600
      %v1121 = vunpack.c.l.b16 %v601
      %v1122 = vunpack.c.l.b16 %v602
      %v1123 = vunpack.c.l.b16 %v603
      %v1124 = vunpack.c.l.b16 %v604
      %v1125 = vunpack.c.l.b16 %v605
      %v1126 = vunpack.c.l.b16 %v606
      %v1127 = vunpack.c.l.b16 %v607
      %v1128 = vunpack.c.l.b16 %v608
      %v1129 = vunpack.c.l.b16 %v609
      %v1130 = vunpack.c.l.b16 %v610
      %v1131 = vunpack.c.l.b16 %v611
      %v1132 = vunpack.c.l.b16 %v612
      %v1133 = vunpack.c.l.b16 %v613
      %v1134 = vunpack.c.l.b16 %v614
      %v1135 = vunpack.c.l.b16 %v615
      %v1136 = vunpack.c.l.b16 %v616
      %v1137 = vunpack.c.l.b16 %v617
      %v1138 = vunpack.c.l.b16 %v618
      %v1139 = vunpack.c.l.b16 %v619
      %v1140 = vunpack.c.l.b16 %v620
      %v1141 = vunpack.c.l.b16 %v621
      %v1142 = vunpack.c.l.b16 %v622
      %v1143 = vunpack.c.l.b16 %v623
      %v1144 = vunpack.c.l.b16 %v624
      %v1145 = vunpack.c.l.b16 %v625
      %v1146 = vunpack.c.l.b16 %v626
      %v1147 = vunpack.c.l.b16 %v627
      %v1148 = vunpack.c.l.b16 %v628
      %v1149 = vunpack.c.l.b16 %v629
      %v1150 = vunpack.c.l.b16 %v630
      %v1151 = vunpack.c.l.b16 %v631
      %v1152 = vunpack.c.l.b16 %v632
      %v1153 = vunpack.c.l.b16 %v633
      %v1154 = vpack.c.b16 %v899, %v898
      %v1155 = vpack.c.b16 %v901, %v900
      %v1156 = vpack.c.b16 %v903, %v902
      %v1157 = vpack.c.b16 %v905, %v904
      %v1158 = vpack.c.b16 %v907, %v906
      %v1159 = vpack.c.b16 %v909, %v908
      %v1160 = vpack.c.b16 %v911, %v910
      %v1161 = vpack.c.b16 %v913, %v912
      %v1162 = vpack.c.b16 %v915, %v914
      %v1163 = vpack.c.b16 %v917, %v916
      %v1164 = vpack.c.b16 %v919, %v918
      %v1165 = vpack.c.b16 %v921, %v920
      %v1166 = vpack.c.b16 %v923, %v922
      %v1167 = vpack.c.b16 %v925, %v924
      %v1168 = vpack.c.b16 %v927, %v926
      %v1169 = vpack.c.b16 %v929, %v928
      %v1170 = vpack.c.b16 %v931, %v930
      %v1171 = vpack.c.b16 %v933, %v932
      %v1172 = vpack.c.b16 %v935, %v934
      %v1173 = vpack.c.b16 %v937, %v936
      %v1174 = vpack.c.b16 %v939, %v938
      %v1175 = vpack.c.b16 %v941, %v940
      %v1176 = vpack.c.b16 %v943, %v942
      %v1177 = vpack.c.b16 %v945, %v944
      %v1178 = vpack.c.b16 %v947, %v946
      %v1179 = vpack.c.b16 %v949, %v948
      %v1180 = vpack.c.b16 %v951, %v950
      %v1181 = vpack.c.b16 %v953, %v952
      %v1182 = vpack.c.b16 %v955, %v954
      %v1183 = vpack.c.b16 %v957, %v956
      %v1184 = vpack.c.b16 %v959, %v958
      %v1185 = vpack.c.b16 %v961, %v960
      %v1186 = vpack.c.b16 %v963, %v962
      %v1187 = vpack.c.b16 %v965, %v964
      %v1188 = vpack.c.b16 %v967, %v966
      %v1189 = vpack.c.b16 %v969, %v968
      %v1190 = vpack.c.b16 %v971, %v970
      %v1191 = vpack.c.b16 %v973, %v972
      %v1192 = vpack.c.b16 %v975, %v974
      %v1193 = vpack.c.b16 %v977, %v976
      %v1194 = vpack.c.b16 %v979, %v978
      %v1195 = vpack.c.b16 %v981, %v980
      %v1196 = vpack.c.b16 %v983, %v982
      %v1197 = vpack.c.b16 %v985, %v984
      %v1198 = vpack.c.b16 %v987, %v986
      %v1199 = vpack.c.b16 %v989, %v988
      %v1200 = vpack.c.b16 %v991, %v990
      %v1201 = vpack.c.b16 %v993, %v992
      %v1202 = vpack.c.b16 %v995, %v994
      %v1203 = vpack.c.b16 %v997, %v996
      %v1204 = vpack.c.b16 %v999, %v998
      %v1205 = vpack.c.b16 %v1001, %v1000
      %v1206 = vpack.c.b16 %v1003, %v1002
      %v1207 = vpack.c.b16 %v1005, %v1004
      %v1208 = vpack.c.b16 %v1007, %v1006
      %v1209 = vpack.c.b16 %v1009, %v1008
      %v1210 = vpack.c.b16 %v1011, %v1010
      %v1211 = vpack.c.b16 %v1013, %v1012
      %v1212 = vpack.c.b16 %v1015, %v1014
      %v1213 = vpack.c.b16 %v1017, %v1016
      %v1214 = vpack.c.b16 %v1019, %v1018
      %v1215 = vpack.c.b16 %v1021, %v1020
      %v1216 = vpack.c.b16 %v1023, %v1022
      %v1217 = vpack.c.b16 %v1025, %v1024
      %v1218 = vpack.c.b16 %v1027, %v1026
      %v1219 = vpack.c.b16 %v1029, %v1028
      %v1220 = vpack.c.b16 %v1031, %v1030
      %v1221 = vpack.c.b16 %v1033, %v1032
      %v1222 = vpack.c.b16 %v1035, %v1034
      %v1223 = vpack.c.b16 %v1037, %v1036
      %v1224 = vpack.c.b16 %v1039, %v1038
      %v1225 = vpack.c.b16 %v1041, %v1040
      %v1226 = vpack.c.b16 %v1043, %v1042
      %v1227 = vpack.c.b16 %v1045, %v1044
      %v1228 = vpack.c.b16 %v1047, %v1046
      %v1229 = vpack.c.b16 %v1049, %v1048
      %v1230 = vpack.c.b16 %v1051, %v1050
      %v1231 = vpack.c.b16 %v1053, %v1052
      %v1232 = vpack.c.b16 %v1055, %v1054
      %v1233 = vpack.c.b16 %v1057, %v1056
      %v1234 = vpack.c.b16 %v1059, %v1058
      %v1235 = vpack.c.b16 %v1061, %v1060
      %v1236 = vpack.c.b16 %v1063, %v1062
      %v1237 = vpack.c.b16 %v1065, %v1064
      %v1238 = vpack.c.b16 %v1067, %v1066
      %v1239 = vpack.c.b16 %v1069, %v1068
      %v1240 = vpack.c.b16 %v1071, %v1070
      %v1241 = vpack.c.b16 %v1073, %v1072
      %v1242 = vpack.c.b16 %v1075, %v1074
      %v1243 = vpack.c.b16 %v1077, %v1076
      %v1244 = vpack.c.b16 %v1079, %v1078
      %v1245 = vpack.c.b16 %v1081, %v1080
      %v1246 = vpack.c.b16 %v1083, %v1082
      %v1247 = vpack.c.b16 %v1085, %v1084
      %v1248 = vpack.c.b16 %v1087, %v1086
      %v1249 = vpack.c.b16 %v1089, %v1088
      %v1250 = vpack.c.b16 %v1091, %v1090
      %v1251 = vpack.c.b16 %v1093, %v1092
      %v1252 = vpack.c.b16 %v1095, %v1094
      %v1253 = vpack.c.b16 %v1097, %v1096
      %v1254 = vpack.c.b16 %v1099, %v1098
      %v1255 = vpack.c.b16 %v1101, %v1100
      %v1256 = vpack.c.b16 %v1103, %v1102
      %v1257 = vpack.c.b16 %v1105, %v1104
      %v1258 = vpack.c.b16 %v1107, %v1106
      %v1259 = vpack.c.b16 %v1109, %v1108
      %v1260 = vpack.c.b16 %v1111, %v1110
      %v1261 = vpack.c.b16 %v1113, %v1112
      %v1262 = vpack.c.b16 %v1115, %v1114
      %v1263 = vpack.c.b16 %v1117, %v1116
      %v1264 = vpack.c.b16 %v1119, %v1118
      %v1265 = vpack.c.b16 %v1121, %v1120
      %v1266 = vpack.c.b16 %v1123, %v1122
      %v1267 = vpack.c.b16 %v1125, %v1124
      %v1268 = vpack.c.b16 %v1127, %v1126
      %v1269 = vpack.c.b16 %v1129, %v1128
      %v1270 = vpack.c.b16 %v1131, %v1130
      %v1271 = vpack.c.b16 %v1133, %v1132
      %v1272 = vpack.c.b16 %v1135, %v1134
      %v1273 = vpack.c.b16 %v1137, %v1136
      %v1274 = vpack.c.b16 %v1139, %v1138
      %v1275 = vpack.c.b16 %v1141, %v1140
      %v1276 = vpack.c.b16 %v1143, %v1142
      %v1277 = vpack.c.b16 %v1145, %v1144
      %v1278 = vpack.c.b16 %v1147, %v1146
      %v1279 = vpack.c.b16 %v1149, %v1148
      %v1280 = vpack.c.b16 %v1151, %v1150
      %v1281 = vpack.c.b16 %v1153, %v1152
      %v1286 = vunpack.c.l.b16 %v634
      %v1287 = vunpack.c.l.b16 %v635
      %v1288 = vunpack.c.l.b16 %v636
      %v1289 = vunpack.c.l.b16 %v637
      %v1290 = vpack.c.b16 %v1287, %v1286
      %v1291 = vpack.c.b16 %v1289, %v1288
      %vm1294 = vcmask 261120
      %v1296 = vsel %vm1294, %v1154, 0
      %v1299 = vsel %vm1294, %v1155, 0
      %v1302 = vsel %vm1294, %v1156, 0
      %v1305 = vsel %vm1294, %v1157, 0
      %v1308 = vsel %vm1294, %v1158, 0
      %v1311 = vsel %vm1294, %v1159, 0
      %v1314 = vsel %vm1294, %v1160, 0
      %v1317 = vsel %vm1294, %v1161, 0
      %v1320 = vsel %vm1294, %v1162, 0
      %v1323 = vsel %vm1294, %v1163, 0
      %v1326 = vsel %vm1294, %v1164, 0
      %v1329 = vsel %vm1294, %v1165, 0
      %v1332 = vsel %vm1294, %v1166, 0
      %v1335 = vsel %vm1294, %v1167, 0
      %v1338 = vsel %vm1294, %v1168, 0
      %v1341 = vsel %vm1294, %v1169, 0
      %v1344 = vsel %vm1294, %v1170, 0
      %v1347 = vsel %vm1294, %v1171, 0
      %v1350 = vsel %vm1294, %v1172, 0
      %v1353 = vsel %vm1294, %v1173, 0
      %v1356 = vsel %vm1294, %v1174, 0
      %v1359 = vsel %vm1294, %v1175, 0
      %v1362 = vsel %vm1294, %v1176, 0
      %v1365 = vsel %vm1294, %v1177, 0
      %v1368 = vsel %vm1294, %v1178, 0
      %v1371 = vsel %vm1294, %v1179, 0
      %v1374 = vsel %vm1294, %v1180, 0
      %v1377 = vsel %vm1294, %v1181, 0
      %v1380 = vsel %vm1294, %v1182, 0
      %v1383 = vsel %vm1294, %v1183, 0
      %v1386 = vsel %vm1294, %v1184, 0
      %v1389 = vsel %vm1294, %v1185, 0
      %v1392 = vsel %vm1294, %v1186, 0
      %v1395 = vsel %vm1294, %v1187, 0
      %v1398 = vsel %vm1294, %v1188, 0
      %v1401 = vsel %vm1294, %v1189, 0
      %v1404 = vsel %vm1294, %v1190, 0
      %v1407 = vsel %vm1294, %v1191, 0
      %v1410 = vsel %vm1294, %v1192, 0
      %v1413 = vsel %vm1294, %v1193, 0
      %v1416 = vsel %vm1294, %v1194, 0
      %v1419 = vsel %vm1294, %v1195, 0
      %v1422 = vsel %vm1294, %v1196, 0
      %v1425 = vsel %vm1294, %v1197, 0
      %v1428 = vsel %vm1294, %v1198, 0
      %v1431 = vsel %vm1294, %v1199, 0
      %v1434 = vsel %vm1294, %v1200, 0
      %v1437 = vsel %vm1294, %v1201, 0
      %v1440 = vsel %vm1294, %v1202, 0
      %v1443 = vsel %vm1294, %v1203, 0
      %v1446 = vsel %vm1294, %v1204, 0
      %v1449 = vsel %vm1294, %v1205, 0
      %v1452 = vsel %vm1294, %v1206, 0
      %v1455 = vsel %vm1294, %v1207, 0
      %v1458 = vsel %vm1294, %v1208, 0
      %v1461 = vsel %vm1294, %v1209, 0
      %v1464 = vsel %vm1294, %v1210, 0
      %v1467 = vsel %vm1294, %v1211, 0
      %v1470 = vsel %vm1294, %v1212, 0
      %v1473 = vsel %vm1294, %v1213, 0
      %v1476 = vsel %vm1294, %v1214, 0
      %v1479 = vsel %vm1294, %v1215, 0
      %v1482 = vsel %vm1294, %v1216, 0
      %v1485 = vsel %vm1294, %v1217, 0
      %v1488 = vsel %vm1294, %v1218, 0
      %v1491 = vsel %vm1294, %v1219, 0
      %v1494 = vsel %vm1294, %v1220, 0
      %v1497 = vsel %vm1294, %v1221, 0
      %v1500 = vsel %vm1294, %v1222, 0
      %v1503 = vsel %vm1294, %v1223, 0
      %v1506 = vsel %vm1294, %v1224, 0
      %v1509 = vsel %vm1294, %v1225, 0
      %v1512 = vsel %vm1294, %v1226, 0
      %v1515 = vsel %vm1294, %v1227, 0
      %v1518 = vsel %vm1294, %v1228, 0
      %v1521 = vsel %vm1294, %v1229, 0
      %v1524 = vsel %vm1294, %v1230, 0
      %v1527 = vsel %vm1294, %v1231, 0
      %v1530 = vsel %vm1294, %v1232, 0
      %v1533 = vsel %vm1294, %v1233, 0
      %v1536 = vsel %vm1294, %v1234, 0
      %v1539 = vsel %vm1294, %v1235, 0
      %v1542 = vsel %vm1294, %v1236, 0
      %v1545 = vsel %vm1294, %v1237, 0
      %v1548 = vsel %vm1294, %v1238, 0
      %v1551 = vsel %vm1294, %v1239, 0
      %v1554 = vsel %vm1294, %v1240, 0
      %v1557 = vsel %vm1294, %v1241, 0
      %v1560 = vsel %vm1294, %v1242, 0
      %v1563 = vsel %vm1294, %v1243, 0
      %v1566 = vsel %vm1294, %v1244, 0
      %v1569 = vsel %vm1294, %v1245, 0
      %v1572 = vsel %vm1294, %v1246, 0
      %v1575 = vsel %vm1294, %v1247, 0
      %v1578 = vsel %vm1294, %v1248, 0
      %v1581 = vsel %vm1294, %v1249, 0
      %v1584 = vsel %vm1294, %v1250, 0
      %v1587 = vsel %vm1294, %v1251, 0
      %v1590 = vsel %vm1294, %v1252, 0
      %v1593 = vsel %vm1294, %v1253, 0
      %v1596 = vsel %vm1294, %v1254, 0
      %v1599 = vsel %vm1294, %v1255, 0
      %v1602 = vsel %vm1294, %v1256, 0
      %v1605 = vsel %vm1294, %v1257, 0
      %v1608 = vsel %vm1294, %v1258, 0
      %v1611 = vsel %vm1294, %v1259, 0
      %v1614 = vsel %vm1294, %v1260, 0
      %v1617 = vsel %vm1294, %v1261, 0
      %v1620 = vsel %vm1294, %v1262, 0
      %v1623 = vsel %vm1294, %v1263, 0
      %v1626 = vsel %vm1294, %v1264, 0
      %v1629 = vsel %vm1294, %v1265, 0
      %v1632 = vsel %vm1294, %v1266, 0
      %v1635 = vsel %vm1294, %v1267, 0
      %v1638 = vsel %vm1294, %v1268, 0
      %v1641 = vsel %vm1294, %v1269, 0
      %v1644 = vsel %vm1294, %v1270, 0
      %v1647 = vsel %vm1294, %v1271, 0
      %v1650 = vsel %vm1294, %v1272, 0
      %v1653 = vsel %vm1294, %v1273, 0
      %v1656 = vsel %vm1294, %v1274, 0
      %v1659 = vsel %vm1294, %v1275, 0
      %v1662 = vsel %vm1294, %v1276, 0
      %v1665 = vsel %vm1294, %v1277, 0
      %v1668 = vsel %vm1294, %v1278, 0
      %v1671 = vsel %vm1294, %v1279, 0
      %v1674 = vsel %vm1294, %v1280, 0
      %v1677 = vsel %vm1294, %v1281, 0
      %1679 = vmatpush.bf16.msra.mxu0 0
      %1680 = vmatpush.bf16.msra.mxu0 0
      %1681 = vmatpush.bf16.msra.mxu0 0
      %1682 = vmatpush.bf16.msra.mxu0 0
      %1683 = vmatpush.bf16.msra.mxu0 0
      %1684 = vmatpush.bf16.msra.mxu0 0
      %1685 = vmatpush.bf16.msra.mxu0 %v1291
      %1686 = vmatpush.bf16.msra.mxu0 %v1290
      %1687 = vmatmul.bf16.gmra.mxu0 %v1296
      %v1688 = vpop.f32.mrf.mxu0
      %v1689 = vadd.f32 %v640, %v1688
      %v1690 = vpop.f32.mrf.mxu0
      %v1691 = vadd.f32 %v640, %v1690
      %1692 = vmatmul.bf16.gmra.mxu0 %v1299
      %v1693 = vpop.f32.mrf.mxu0
      %v1694 = vadd.f32 %v640, %v1693
      %v1695 = vpop.f32.mrf.mxu0
      %v1696 = vadd.f32 %v640, %v1695
      %1697 = vmatmul.bf16.gmra.mxu0 %v1302
      %v1698 = vpop.f32.mrf.mxu0
      %v1699 = vadd.f32 %v640, %v1698
      %v1700 = vpop.f32.mrf.mxu0
      %v1701 = vadd.f32 %v640, %v1700
      %1702 = vmatmul.bf16.gmra.mxu0 %v1305
      %v1703 = vpop.f32.mrf.mxu0
      %v1704 = vadd.f32 %v640, %v1703
      %v1705 = vpop.f32.mrf.mxu0
      %v1706 = vadd.f32 %v640, %v1705
      %1707 = vmatmul.bf16.gmra.mxu0 %v1308
      %v1708 = vpop.f32.mrf.mxu0
      %v1709 = vadd.f32 %v640, %v1708
      %v1710 = vpop.f32.mrf.mxu0
      %v1711 = vadd.f32 %v640, %v1710
      %1712 = vmatmul.bf16.gmra.mxu0 %v1311
      %v1713 = vpop.f32.mrf.mxu0
      %v1714 = vadd.f32 %v640, %v1713
      %v1715 = vpop.f32.mrf.mxu0
      %v1716 = vadd.f32 %v640, %v1715
      %1717 = vmatmul.bf16.gmra.mxu0 %v1314
      %v1718 = vpop.f32.mrf.mxu0
      %v1719 = vadd.f32 %v640, %v1718
      %v1720 = vpop.f32.mrf.mxu0
      %v1721 = vadd.f32 %v640, %v1720
      %1722 = vmatmul.bf16.gmra.mxu0 %v1317
      %v1723 = vpop.f32.mrf.mxu0
      %v1724 = vadd.f32 %v640, %v1723
      %v1725 = vpop.f32.mrf.mxu0
      %v1726 = vadd.f32 %v640, %v1725
      %1727 = vmatmul.bf16.gmra.mxu0 %v1320
      %v1728 = vpop.f32.mrf.mxu0
      %v1729 = vadd.f32 %v640, %v1728
      %v1730 = vpop.f32.mrf.mxu0
      %v1731 = vadd.f32 %v640, %v1730
      %1732 = vmatmul.bf16.gmra.mxu0 %v1323
      %v1733 = vpop.f32.mrf.mxu0
      %v1734 = vadd.f32 %v640, %v1733
      %v1735 = vpop.f32.mrf.mxu0
      %v1736 = vadd.f32 %v640, %v1735
      %1737 = vmatmul.bf16.gmra.mxu0 %v1326
      %v1738 = vpop.f32.mrf.mxu0
      %v1739 = vadd.f32 %v640, %v1738
      %v1740 = vpop.f32.mrf.mxu0
      %v1741 = vadd.f32 %v640, %v1740
      %1742 = vmatmul.bf16.gmra.mxu0 %v1329
      %v1743 = vpop.f32.mrf.mxu0
      %v1744 = vadd.f32 %v640, %v1743
      %v1745 = vpop.f32.mrf.mxu0
      %v1746 = vadd.f32 %v640, %v1745
      %1747 = vmatmul.bf16.gmra.mxu0 %v1332
      %v1748 = vpop.f32.mrf.mxu0
      %v1749 = vadd.f32 %v640, %v1748
      %v1750 = vpop.f32.mrf.mxu0
      %v1751 = vadd.f32 %v640, %v1750
      %1752 = vmatmul.bf16.gmra.mxu0 %v1335
      %v1753 = vpop.f32.mrf.mxu0
      %v1754 = vadd.f32 %v640, %v1753
      %v1755 = vpop.f32.mrf.mxu0
      %v1756 = vadd.f32 %v640, %v1755
      %1757 = vmatmul.bf16.gmra.mxu0 %v1338
      %v1758 = vpop.f32.mrf.mxu0
      %v1759 = vadd.f32 %v640, %v1758
      %v1760 = vpop.f32.mrf.mxu0
      %v1761 = vadd.f32 %v640, %v1760
      %1762 = vmatmul.bf16.gmra.mxu0 %v1341
      %v1763 = vpop.f32.mrf.mxu0
      %v1764 = vadd.f32 %v640, %v1763
      %v1765 = vpop.f32.mrf.mxu0
      %v1766 = vadd.f32 %v640, %v1765
      %1767 = vmatmul.bf16.gmra.mxu0 %v1344
      %v1768 = vpop.f32.mrf.mxu0
      %v1769 = vadd.f32 %v640, %v1768
      %v1770 = vpop.f32.mrf.mxu0
      %v1771 = vadd.f32 %v640, %v1770
      %1772 = vmatmul.bf16.gmra.mxu0 %v1347
      %v1773 = vpop.f32.mrf.mxu0
      %v1774 = vadd.f32 %v640, %v1773
      %v1775 = vpop.f32.mrf.mxu0
      %v1776 = vadd.f32 %v640, %v1775
      %1777 = vmatmul.bf16.gmra.mxu0 %v1350
      %v1778 = vpop.f32.mrf.mxu0
      %v1779 = vadd.f32 %v640, %v1778
      %v1780 = vpop.f32.mrf.mxu0
      %v1781 = vadd.f32 %v640, %v1780
      %1782 = vmatmul.bf16.gmra.mxu0 %v1353
      %v1783 = vpop.f32.mrf.mxu0
      %v1784 = vadd.f32 %v640, %v1783
      %v1785 = vpop.f32.mrf.mxu0
      %v1786 = vadd.f32 %v640, %v1785
      %1787 = vmatmul.bf16.gmra.mxu0 %v1356
      %v1788 = vpop.f32.mrf.mxu0
      %v1789 = vadd.f32 %v640, %v1788
      %v1790 = vpop.f32.mrf.mxu0
      %v1791 = vadd.f32 %v640, %v1790
      %1792 = vmatmul.bf16.gmra.mxu0 %v1359
      %v1793 = vpop.f32.mrf.mxu0
      %v1794 = vadd.f32 %v640, %v1793
      %v1795 = vpop.f32.mrf.mxu0
      %v1796 = vadd.f32 %v640, %v1795
      %1797 = vmatmul.bf16.gmra.mxu0 %v1362
      %v1798 = vpop.f32.mrf.mxu0
      %v1799 = vadd.f32 %v640, %v1798
      %v1800 = vpop.f32.mrf.mxu0
      %v1801 = vadd.f32 %v640, %v1800
      %1802 = vmatmul.bf16.gmra.mxu0 %v1365
      %v1803 = vpop.f32.mrf.mxu0
      %v1804 = vadd.f32 %v640, %v1803
      %v1805 = vpop.f32.mrf.mxu0
      %v1806 = vadd.f32 %v640, %v1805
      %1807 = vmatmul.bf16.gmra.mxu0 %v1368
      %v1808 = vpop.f32.mrf.mxu0
      %v1809 = vadd.f32 %v640, %v1808
      %v1810 = vpop.f32.mrf.mxu0
      %v1811 = vadd.f32 %v640, %v1810
      %1812 = vmatmul.bf16.gmra.mxu0 %v1371
      %v1813 = vpop.f32.mrf.mxu0
      %v1814 = vadd.f32 %v640, %v1813
      %v1815 = vpop.f32.mrf.mxu0
      %v1816 = vadd.f32 %v640, %v1815
      %1817 = vmatmul.bf16.gmra.mxu0 %v1374
      %v1818 = vpop.f32.mrf.mxu0
      %v1819 = vadd.f32 %v640, %v1818
      %v1820 = vpop.f32.mrf.mxu0
      %v1821 = vadd.f32 %v640, %v1820
      %1822 = vmatmul.bf16.gmra.mxu0 %v1377
      %v1823 = vpop.f32.mrf.mxu0
      %v1824 = vadd.f32 %v640, %v1823
      %v1825 = vpop.f32.mrf.mxu0
      %v1826 = vadd.f32 %v640, %v1825
      %1827 = vmatmul.bf16.gmra.mxu0 %v1380
      %v1828 = vpop.f32.mrf.mxu0
      %v1829 = vadd.f32 %v640, %v1828
      %v1830 = vpop.f32.mrf.mxu0
      %v1831 = vadd.f32 %v640, %v1830
      %1832 = vmatmul.bf16.gmra.mxu0 %v1383
      %v1833 = vpop.f32.mrf.mxu0
      %v1834 = vadd.f32 %v640, %v1833
      %v1835 = vpop.f32.mrf.mxu0
      %v1836 = vadd.f32 %v640, %v1835
      %1837 = vmatmul.bf16.gmra.mxu0 %v1386
      %v1838 = vpop.f32.mrf.mxu0
      %v1839 = vadd.f32 %v640, %v1838
      %v1840 = vpop.f32.mrf.mxu0
      %v1841 = vadd.f32 %v640, %v1840
      %1842 = vmatmul.bf16.gmra.mxu0 %v1389
      %v1843 = vpop.f32.mrf.mxu0
      %v1844 = vadd.f32 %v640, %v1843
      %v1845 = vpop.f32.mrf.mxu0
      %v1846 = vadd.f32 %v640, %v1845
      %1847 = vmatmul.bf16.gmra.mxu0 %v1392
      %v1848 = vpop.f32.mrf.mxu0
      %v1849 = vadd.f32 %v640, %v1848
      %v1850 = vpop.f32.mrf.mxu0
      %v1851 = vadd.f32 %v640, %v1850
      %1852 = vmatmul.bf16.gmra.mxu0 %v1395
      %v1853 = vpop.f32.mrf.mxu0
      %v1854 = vadd.f32 %v640, %v1853
      %v1855 = vpop.f32.mrf.mxu0
      %v1856 = vadd.f32 %v640, %v1855
      %1857 = vmatmul.bf16.gmra.mxu0 %v1398
      %v1858 = vpop.f32.mrf.mxu0
      %v1859 = vadd.f32 %v640, %v1858
      %v1860 = vpop.f32.mrf.mxu0
      %v1861 = vadd.f32 %v640, %v1860
      %1862 = vmatmul.bf16.gmra.mxu0 %v1401
      %v1863 = vpop.f32.mrf.mxu0
      %v1864 = vadd.f32 %v640, %v1863
      %v1865 = vpop.f32.mrf.mxu0
      %v1866 = vadd.f32 %v640, %v1865
      %1867 = vmatmul.bf16.gmra.mxu0 %v1404
      %v1868 = vpop.f32.mrf.mxu0
      %v1869 = vadd.f32 %v640, %v1868
      %v1870 = vpop.f32.mrf.mxu0
      %v1871 = vadd.f32 %v640, %v1870
      %1872 = vmatmul.bf16.gmra.mxu0 %v1407
      %v1873 = vpop.f32.mrf.mxu0
      %v1874 = vadd.f32 %v640, %v1873
      %v1875 = vpop.f32.mrf.mxu0
      %v1876 = vadd.f32 %v640, %v1875
      %1877 = vmatmul.bf16.gmra.mxu0 %v1410
      %v1878 = vpop.f32.mrf.mxu0
      %v1879 = vadd.f32 %v640, %v1878
      %v1880 = vpop.f32.mrf.mxu0
      %v1881 = vadd.f32 %v640, %v1880
      %1882 = vmatmul.bf16.gmra.mxu0 %v1413
      %v1883 = vpop.f32.mrf.mxu0
      %v1884 = vadd.f32 %v640, %v1883
      %v1885 = vpop.f32.mrf.mxu0
      %v1886 = vadd.f32 %v640, %v1885
      %1887 = vmatmul.bf16.gmra.mxu0 %v1416
      %v1888 = vpop.f32.mrf.mxu0
      %v1889 = vadd.f32 %v640, %v1888
      %v1890 = vpop.f32.mrf.mxu0
      %v1891 = vadd.f32 %v640, %v1890
      %1892 = vmatmul.bf16.gmra.mxu0 %v1419
      %v1893 = vpop.f32.mrf.mxu0
      %v1894 = vadd.f32 %v640, %v1893
      %v1895 = vpop.f32.mrf.mxu0
      %v1896 = vadd.f32 %v640, %v1895
      %1897 = vmatmul.bf16.gmra.mxu0 %v1422
      %v1898 = vpop.f32.mrf.mxu0
      %v1899 = vadd.f32 %v640, %v1898
      %v1900 = vpop.f32.mrf.mxu0
      %v1901 = vadd.f32 %v640, %v1900
      %1902 = vmatmul.bf16.gmra.mxu0 %v1425
      %v1903 = vpop.f32.mrf.mxu0
      %v1904 = vadd.f32 %v640, %v1903
      %v1905 = vpop.f32.mrf.mxu0
      %v1906 = vadd.f32 %v640, %v1905
      %1907 = vmatmul.bf16.gmra.mxu0 %v1428
      %v1908 = vpop.f32.mrf.mxu0
      %v1909 = vadd.f32 %v640, %v1908
      %v1910 = vpop.f32.mrf.mxu0
      %v1911 = vadd.f32 %v640, %v1910
      %1912 = vmatmul.bf16.gmra.mxu0 %v1431
      %v1913 = vpop.f32.mrf.mxu0
      %v1914 = vadd.f32 %v640, %v1913
      %v1915 = vpop.f32.mrf.mxu0
      %v1916 = vadd.f32 %v640, %v1915
      %1917 = vmatmul.bf16.gmra.mxu0 %v1434
      %v1918 = vpop.f32.mrf.mxu0
      %v1919 = vadd.f32 %v640, %v1918
      %v1920 = vpop.f32.mrf.mxu0
      %v1921 = vadd.f32 %v640, %v1920
      %1922 = vmatmul.bf16.gmra.mxu0 %v1437
      %v1923 = vpop.f32.mrf.mxu0
      %v1924 = vadd.f32 %v640, %v1923
      %v1925 = vpop.f32.mrf.mxu0
      %v1926 = vadd.f32 %v640, %v1925
      %1927 = vmatmul.bf16.gmra.mxu0 %v1440
      %v1928 = vpop.f32.mrf.mxu0
      %v1929 = vadd.f32 %v640, %v1928
      %v1930 = vpop.f32.mrf.mxu0
      %v1931 = vadd.f32 %v640, %v1930
      %1932 = vmatmul.bf16.gmra.mxu0 %v1443
      %v1933 = vpop.f32.mrf.mxu0
      %v1934 = vadd.f32 %v640, %v1933
      %v1935 = vpop.f32.mrf.mxu0
      %v1936 = vadd.f32 %v640, %v1935
      %1937 = vmatmul.bf16.gmra.mxu0 %v1446
      %v1938 = vpop.f32.mrf.mxu0
      %v1939 = vadd.f32 %v640, %v1938
      %v1940 = vpop.f32.mrf.mxu0
      %v1941 = vadd.f32 %v640, %v1940
      %1942 = vmatmul.bf16.gmra.mxu0 %v1449
      %v1943 = vpop.f32.mrf.mxu0
      %v1944 = vadd.f32 %v640, %v1943
      %v1945 = vpop.f32.mrf.mxu0
      %v1946 = vadd.f32 %v640, %v1945
      %1947 = vmatmul.bf16.gmra.mxu0 %v1452
      %v1948 = vpop.f32.mrf.mxu0
      %v1949 = vadd.f32 %v640, %v1948
      %v1950 = vpop.f32.mrf.mxu0
      %v1951 = vadd.f32 %v640, %v1950
      %1952 = vmatmul.bf16.gmra.mxu0 %v1455
      %v1953 = vpop.f32.mrf.mxu0
      %v1954 = vadd.f32 %v640, %v1953
      %v1955 = vpop.f32.mrf.mxu0
      %v1956 = vadd.f32 %v640, %v1955
      %1957 = vmatmul.bf16.gmra.mxu0 %v1458
      %v1958 = vpop.f32.mrf.mxu0
      %v1959 = vadd.f32 %v640, %v1958
      %v1960 = vpop.f32.mrf.mxu0
      %v1961 = vadd.f32 %v640, %v1960
      %1962 = vmatmul.bf16.gmra.mxu0 %v1461
      %v1963 = vpop.f32.mrf.mxu0
      %v1964 = vadd.f32 %v640, %v1963
      %v1965 = vpop.f32.mrf.mxu0
      %v1966 = vadd.f32 %v640, %v1965
      %1967 = vmatmul.bf16.gmra.mxu0 %v1464
      %v1968 = vpop.f32.mrf.mxu0
      %v1969 = vadd.f32 %v640, %v1968
      %v1970 = vpop.f32.mrf.mxu0
      %v1971 = vadd.f32 %v640, %v1970
      %1972 = vmatmul.bf16.gmra.mxu0 %v1467
      %v1973 = vpop.f32.mrf.mxu0
      %v1974 = vadd.f32 %v640, %v1973
      %v1975 = vpop.f32.mrf.mxu0
      %v1976 = vadd.f32 %v640, %v1975
      %1977 = vmatmul.bf16.gmra.mxu0 %v1470
      %v1978 = vpop.f32.mrf.mxu0
      %v1979 = vadd.f32 %v640, %v1978
      %v1980 = vpop.f32.mrf.mxu0
      %v1981 = vadd.f32 %v640, %v1980
      %1982 = vmatmul.bf16.gmra.mxu0 %v1473
      %v1983 = vpop.f32.mrf.mxu0
      %v1984 = vadd.f32 %v640, %v1983
      %v1985 = vpop.f32.mrf.mxu0
      %v1986 = vadd.f32 %v640, %v1985
      %1987 = vmatmul.bf16.gmra.mxu0 %v1476
      %v1988 = vpop.f32.mrf.mxu0
      %v1989 = vadd.f32 %v640, %v1988
      %v1990 = vpop.f32.mrf.mxu0
      %v1991 = vadd.f32 %v640, %v1990
      %1992 = vmatmul.bf16.gmra.mxu0 %v1479
      %v1993 = vpop.f32.mrf.mxu0
      %v1994 = vadd.f32 %v640, %v1993
      %v1995 = vpop.f32.mrf.mxu0
      %v1996 = vadd.f32 %v640, %v1995
      %1997 = vmatmul.bf16.gmra.mxu0 %v1482
      %v1998 = vpop.f32.mrf.mxu0
      %v1999 = vadd.f32 %v640, %v1998
      %v2000 = vpop.f32.mrf.mxu0
      %v2001 = vadd.f32 %v640, %v2000
      %2002 = vmatmul.bf16.gmra.mxu0 %v1485
      %v2003 = vpop.f32.mrf.mxu0
      %v2004 = vadd.f32 %v640, %v2003
      %v2005 = vpop.f32.mrf.mxu0
      %v2006 = vadd.f32 %v640, %v2005
      %2007 = vmatmul.bf16.gmra.mxu0 %v1488
      %v2008 = vpop.f32.mrf.mxu0
      %v2009 = vadd.f32 %v640, %v2008
      %v2010 = vpop.f32.mrf.mxu0
      %v2011 = vadd.f32 %v640, %v2010
      %2012 = vmatmul.bf16.gmra.mxu0 %v1491
      %v2013 = vpop.f32.mrf.mxu0
      %v2014 = vadd.f32 %v640, %v2013
      %v2015 = vpop.f32.mrf.mxu0
      %v2016 = vadd.f32 %v640, %v2015
      %2017 = vmatmul.bf16.gmra.mxu0 %v1494
      %v2018 = vpop.f32.mrf.mxu0
      %v2019 = vadd.f32 %v640, %v2018
      %v2020 = vpop.f32.mrf.mxu0
      %v2021 = vadd.f32 %v640, %v2020
      %2022 = vmatmul.bf16.gmra.mxu0 %v1497
      %v2023 = vpop.f32.mrf.mxu0
      %v2024 = vadd.f32 %v640, %v2023
      %v2025 = vpop.f32.mrf.mxu0
      %v2026 = vadd.f32 %v640, %v2025
      %2027 = vmatmul.bf16.gmra.mxu0 %v1500
      %v2028 = vpop.f32.mrf.mxu0
      %v2029 = vadd.f32 %v640, %v2028
      %v2030 = vpop.f32.mrf.mxu0
      %v2031 = vadd.f32 %v640, %v2030
      %2032 = vmatmul.bf16.gmra.mxu0 %v1503
      %v2033 = vpop.f32.mrf.mxu0
      %v2034 = vadd.f32 %v640, %v2033
      %v2035 = vpop.f32.mrf.mxu0
      %v2036 = vadd.f32 %v640, %v2035
      %2037 = vmatmul.bf16.gmra.mxu0 %v1506
      %v2038 = vpop.f32.mrf.mxu0
      %v2039 = vadd.f32 %v640, %v2038
      %v2040 = vpop.f32.mrf.mxu0
      %v2041 = vadd.f32 %v640, %v2040
      %2042 = vmatmul.bf16.gmra.mxu0 %v1509
      %v2043 = vpop.f32.mrf.mxu0
      %v2044 = vadd.f32 %v640, %v2043
      %v2045 = vpop.f32.mrf.mxu0
      %v2046 = vadd.f32 %v640, %v2045
      %2047 = vmatmul.bf16.gmra.mxu0 %v1512
      %v2048 = vpop.f32.mrf.mxu0
      %v2049 = vadd.f32 %v640, %v2048
      %v2050 = vpop.f32.mrf.mxu0
      %v2051 = vadd.f32 %v640, %v2050
      %2052 = vmatmul.bf16.gmra.mxu0 %v1515
      %v2053 = vpop.f32.mrf.mxu0
      %v2054 = vadd.f32 %v640, %v2053
      %v2055 = vpop.f32.mrf.mxu0
      %v2056 = vadd.f32 %v640, %v2055
      %2057 = vmatmul.bf16.gmra.mxu0 %v1518
      %v2058 = vpop.f32.mrf.mxu0
      %v2059 = vadd.f32 %v640, %v2058
      %v2060 = vpop.f32.mrf.mxu0
      %v2061 = vadd.f32 %v640, %v2060
      %2062 = vmatmul.bf16.gmra.mxu0 %v1521
      %v2063 = vpop.f32.mrf.mxu0
      %v2064 = vadd.f32 %v640, %v2063
      %v2065 = vpop.f32.mrf.mxu0
      %v2066 = vadd.f32 %v640, %v2065
      %2067 = vmatmul.bf16.gmra.mxu0 %v1524
      %v2068 = vpop.f32.mrf.mxu0
      %v2069 = vadd.f32 %v640, %v2068
      %v2070 = vpop.f32.mrf.mxu0
      %v2071 = vadd.f32 %v640, %v2070
      %2072 = vmatmul.bf16.gmra.mxu0 %v1527
      %v2073 = vpop.f32.mrf.mxu0
      %v2074 = vadd.f32 %v640, %v2073
      %v2075 = vpop.f32.mrf.mxu0
      %v2076 = vadd.f32 %v640, %v2075
      %2077 = vmatmul.bf16.gmra.mxu0 %v1530
      %v2078 = vpop.f32.mrf.mxu0
      %v2079 = vadd.f32 %v640, %v2078
      %v2080 = vpop.f32.mrf.mxu0
      %v2081 = vadd.f32 %v640, %v2080
      %2082 = vmatmul.bf16.gmra.mxu0 %v1533
      %v2083 = vpop.f32.mrf.mxu0
      %v2084 = vadd.f32 %v640, %v2083
      %v2085 = vpop.f32.mrf.mxu0
      %v2086 = vadd.f32 %v640, %v2085
      %2087 = vmatmul.bf16.gmra.mxu0 %v1536
      %v2088 = vpop.f32.mrf.mxu0
      %v2089 = vadd.f32 %v640, %v2088
      %v2090 = vpop.f32.mrf.mxu0
      %v2091 = vadd.f32 %v640, %v2090
      %2092 = vmatmul.bf16.gmra.mxu0 %v1539
      %v2093 = vpop.f32.mrf.mxu0
      %v2094 = vadd.f32 %v640, %v2093
      %v2095 = vpop.f32.mrf.mxu0
      %v2096 = vadd.f32 %v640, %v2095
      %2097 = vmatmul.bf16.gmra.mxu0 %v1542
      %v2098 = vpop.f32.mrf.mxu0
      %v2099 = vadd.f32 %v640, %v2098
      %v2100 = vpop.f32.mrf.mxu0
      %v2101 = vadd.f32 %v640, %v2100
      %2102 = vmatmul.bf16.gmra.mxu0 %v1545
      %v2103 = vpop.f32.mrf.mxu0
      %v2104 = vadd.f32 %v640, %v2103
      %v2105 = vpop.f32.mrf.mxu0
      %v2106 = vadd.f32 %v640, %v2105
      %2107 = vmatmul.bf16.gmra.mxu0 %v1548
      %v2108 = vpop.f32.mrf.mxu0
      %v2109 = vadd.f32 %v640, %v2108
      %v2110 = vpop.f32.mrf.mxu0
      %v2111 = vadd.f32 %v640, %v2110
      %2112 = vmatmul.bf16.gmra.mxu0 %v1551
      %v2113 = vpop.f32.mrf.mxu0
      %v2114 = vadd.f32 %v640, %v2113
      %v2115 = vpop.f32.mrf.mxu0
      %v2116 = vadd.f32 %v640, %v2115
      %2117 = vmatmul.bf16.gmra.mxu0 %v1554
      %v2118 = vpop.f32.mrf.mxu0
      %v2119 = vadd.f32 %v640, %v2118
      %v2120 = vpop.f32.mrf.mxu0
      %v2121 = vadd.f32 %v640, %v2120
      %2122 = vmatmul.bf16.gmra.mxu0 %v1557
      %v2123 = vpop.f32.mrf.mxu0
      %v2124 = vadd.f32 %v640, %v2123
      %v2125 = vpop.f32.mrf.mxu0
      %v2126 = vadd.f32 %v640, %v2125
      %2127 = vmatmul.bf16.gmra.mxu0 %v1560
      %v2128 = vpop.f32.mrf.mxu0
      %v2129 = vadd.f32 %v640, %v2128
      %v2130 = vpop.f32.mrf.mxu0
      %v2131 = vadd.f32 %v640, %v2130
      %2132 = vmatmul.bf16.gmra.mxu0 %v1563
      %v2133 = vpop.f32.mrf.mxu0
      %v2134 = vadd.f32 %v640, %v2133
      %v2135 = vpop.f32.mrf.mxu0
      %v2136 = vadd.f32 %v640, %v2135
      %2137 = vmatmul.bf16.gmra.mxu0 %v1566
      %v2138 = vpop.f32.mrf.mxu0
      %v2139 = vadd.f32 %v640, %v2138
      %v2140 = vpop.f32.mrf.mxu0
      %v2141 = vadd.f32 %v640, %v2140
      %2142 = vmatmul.bf16.gmra.mxu0 %v1569
      %v2143 = vpop.f32.mrf.mxu0
      %v2144 = vadd.f32 %v640, %v2143
      %v2145 = vpop.f32.mrf.mxu0
      %v2146 = vadd.f32 %v640, %v2145
      %2147 = vmatmul.bf16.gmra.mxu0 %v1572
      %v2148 = vpop.f32.mrf.mxu0
      %v2149 = vadd.f32 %v640, %v2148
      %v2150 = vpop.f32.mrf.mxu0
      %v2151 = vadd.f32 %v640, %v2150
      %2152 = vmatmul.bf16.gmra.mxu0 %v1575
      %v2153 = vpop.f32.mrf.mxu0
      %v2154 = vadd.f32 %v640, %v2153
      %v2155 = vpop.f32.mrf.mxu0
      %v2156 = vadd.f32 %v640, %v2155
      %2157 = vmatmul.bf16.gmra.mxu0 %v1578
      %v2158 = vpop.f32.mrf.mxu0
      %v2159 = vadd.f32 %v640, %v2158
      %v2160 = vpop.f32.mrf.mxu0
      %v2161 = vadd.f32 %v640, %v2160
      %2162 = vmatmul.bf16.gmra.mxu0 %v1581
      %v2163 = vpop.f32.mrf.mxu0
      %v2164 = vadd.f32 %v640, %v2163
      %v2165 = vpop.f32.mrf.mxu0
      %v2166 = vadd.f32 %v640, %v2165
      %2167 = vmatmul.bf16.gmra.mxu0 %v1584
      %v2168 = vpop.f32.mrf.mxu0
      %v2169 = vadd.f32 %v640, %v2168
      %v2170 = vpop.f32.mrf.mxu0
      %v2171 = vadd.f32 %v640, %v2170
      %2172 = vmatmul.bf16.gmra.mxu0 %v1587
      %v2173 = vpop.f32.mrf.mxu0
      %v2174 = vadd.f32 %v640, %v2173
      %v2175 = vpop.f32.mrf.mxu0
      %v2176 = vadd.f32 %v640, %v2175
      %2177 = vmatmul.bf16.gmra.mxu0 %v1590
      %v2178 = vpop.f32.mrf.mxu0
      %v2179 = vadd.f32 %v640, %v2178
      %v2180 = vpop.f32.mrf.mxu0
      %v2181 = vadd.f32 %v640, %v2180
      %2182 = vmatmul.bf16.gmra.mxu0 %v1593
      %v2183 = vpop.f32.mrf.mxu0
      %v2184 = vadd.f32 %v640, %v2183
      %v2185 = vpop.f32.mrf.mxu0
      %v2186 = vadd.f32 %v640, %v2185
      %2187 = vmatmul.bf16.gmra.mxu0 %v1596
      %v2188 = vpop.f32.mrf.mxu0
      %v2189 = vadd.f32 %v640, %v2188
      %v2190 = vpop.f32.mrf.mxu0
      %v2191 = vadd.f32 %v640, %v2190
      %2192 = vmatmul.bf16.gmra.mxu0 %v1599
      %v2193 = vpop.f32.mrf.mxu0
      %v2194 = vadd.f32 %v640, %v2193
      %v2195 = vpop.f32.mrf.mxu0
      %v2196 = vadd.f32 %v640, %v2195
      %2197 = vmatmul.bf16.gmra.mxu0 %v1602
      %v2198 = vpop.f32.mrf.mxu0
      %v2199 = vadd.f32 %v640, %v2198
      %v2200 = vpop.f32.mrf.mxu0
      %v2201 = vadd.f32 %v640, %v2200
      %2202 = vmatmul.bf16.gmra.mxu0 %v1605
      %v2203 = vpop.f32.mrf.mxu0
      %v2204 = vadd.f32 %v640, %v2203
      %v2205 = vpop.f32.mrf.mxu0
      %v2206 = vadd.f32 %v640, %v2205
      %2207 = vmatmul.bf16.gmra.mxu0 %v1608
      %v2208 = vpop.f32.mrf.mxu0
      %v2209 = vadd.f32 %v640, %v2208
      %v2210 = vpop.f32.mrf.mxu0
      %v2211 = vadd.f32 %v640, %v2210
      %2212 = vmatmul.bf16.gmra.mxu0 %v1611
      %v2213 = vpop.f32.mrf.mxu0
      %v2214 = vadd.f32 %v640, %v2213
      %v2215 = vpop.f32.mrf.mxu0
      %v2216 = vadd.f32 %v640, %v2215
      %2217 = vmatmul.bf16.gmra.mxu0 %v1614
      %v2218 = vpop.f32.mrf.mxu0
      %v2219 = vadd.f32 %v640, %v2218
      %v2220 = vpop.f32.mrf.mxu0
      %v2221 = vadd.f32 %v640, %v2220
      %2222 = vmatmul.bf16.gmra.mxu0 %v1617
      %v2223 = vpop.f32.mrf.mxu0
      %v2224 = vadd.f32 %v640, %v2223
      %v2225 = vpop.f32.mrf.mxu0
      %v2226 = vadd.f32 %v640, %v2225
      %2227 = vmatmul.bf16.gmra.mxu0 %v1620
      %v2228 = vpop.f32.mrf.mxu0
      %v2229 = vadd.f32 %v640, %v2228
      %v2230 = vpop.f32.mrf.mxu0
      %v2231 = vadd.f32 %v640, %v2230
      %2232 = vmatmul.bf16.gmra.mxu0 %v1623
      %v2233 = vpop.f32.mrf.mxu0
      %v2234 = vadd.f32 %v640, %v2233
      %v2235 = vpop.f32.mrf.mxu0
      %v2236 = vadd.f32 %v640, %v2235
      %2237 = vmatmul.bf16.gmra.mxu0 %v1626
      %v2238 = vpop.f32.mrf.mxu0
      %v2239 = vadd.f32 %v640, %v2238
      %v2240 = vpop.f32.mrf.mxu0
      %v2241 = vadd.f32 %v640, %v2240
      %2242 = vmatmul.bf16.gmra.mxu0 %v1629
      %v2243 = vpop.f32.mrf.mxu0
      %v2244 = vadd.f32 %v640, %v2243
      %v2245 = vpop.f32.mrf.mxu0
      %v2246 = vadd.f32 %v640, %v2245
      %2247 = vmatmul.bf16.gmra.mxu0 %v1632
      %v2248 = vpop.f32.mrf.mxu0
      %v2249 = vadd.f32 %v640, %v2248
      %v2250 = vpop.f32.mrf.mxu0
      %v2251 = vadd.f32 %v640, %v2250
      %2252 = vmatmul.bf16.gmra.mxu0 %v1635
      %v2253 = vpop.f32.mrf.mxu0
      %v2254 = vadd.f32 %v640, %v2253
      %v2255 = vpop.f32.mrf.mxu0
      %v2256 = vadd.f32 %v640, %v2255
      %2257 = vmatmul.bf16.gmra.mxu0 %v1638
      %v2258 = vpop.f32.mrf.mxu0
      %v2259 = vadd.f32 %v640, %v2258
      %v2260 = vpop.f32.mrf.mxu0
      %v2261 = vadd.f32 %v640, %v2260
      %2262 = vmatmul.bf16.gmra.mxu0 %v1641
      %v2263 = vpop.f32.mrf.mxu0
      %v2264 = vadd.f32 %v640, %v2263
      %v2265 = vpop.f32.mrf.mxu0
      %v2266 = vadd.f32 %v640, %v2265
      %2267 = vmatmul.bf16.gmra.mxu0 %v1644
      %v2268 = vpop.f32.mrf.mxu0
      %v2269 = vadd.f32 %v640, %v2268
      %v2270 = vpop.f32.mrf.mxu0
      %v2271 = vadd.f32 %v640, %v2270
      %2272 = vmatmul.bf16.gmra.mxu0 %v1647
      %v2273 = vpop.f32.mrf.mxu0
      %v2274 = vadd.f32 %v640, %v2273
      %v2275 = vpop.f32.mrf.mxu0
      %v2276 = vadd.f32 %v640, %v2275
      %2277 = vmatmul.bf16.gmra.mxu0 %v1650
      %v2278 = vpop.f32.mrf.mxu0
      %v2279 = vadd.f32 %v640, %v2278
      %v2280 = vpop.f32.mrf.mxu0
      %v2281 = vadd.f32 %v640, %v2280
      %2282 = vmatmul.bf16.gmra.mxu0 %v1653
      %v2283 = vpop.f32.mrf.mxu0
      %v2284 = vadd.f32 %v640, %v2283
      %v2285 = vpop.f32.mrf.mxu0
      %v2286 = vadd.f32 %v640, %v2285
      %2287 = vmatmul.bf16.gmra.mxu0 %v1656
      %v2288 = vpop.f32.mrf.mxu0
      %v2289 = vadd.f32 %v640, %v2288
      %v2290 = vpop.f32.mrf.mxu0
      %v2291 = vadd.f32 %v640, %v2290
      %2292 = vmatmul.bf16.gmra.mxu0 %v1659
      %v2293 = vpop.f32.mrf.mxu0
      %v2294 = vadd.f32 %v640, %v2293
      %v2295 = vpop.f32.mrf.mxu0
      %v2296 = vadd.f32 %v640, %v2295
      %2297 = vmatmul.bf16.gmra.mxu0 %v1662
      %v2298 = vpop.f32.mrf.mxu0
      %v2299 = vadd.f32 %v640, %v2298
      %v2300 = vpop.f32.mrf.mxu0
      %v2301 = vadd.f32 %v640, %v2300
      %2302 = vmatmul.bf16.gmra.mxu0 %v1665
      %v2303 = vpop.f32.mrf.mxu0
      %v2304 = vadd.f32 %v640, %v2303
      %v2305 = vpop.f32.mrf.mxu0
      %v2306 = vadd.f32 %v640, %v2305
      %2307 = vmatmul.bf16.gmra.mxu0 %v1668
      %v2308 = vpop.f32.mrf.mxu0
      %v2309 = vadd.f32 %v640, %v2308
      %v2310 = vpop.f32.mrf.mxu0
      %v2311 = vadd.f32 %v640, %v2310
      %2312 = vmatmul.bf16.gmra.mxu0 %v1671
      %v2313 = vpop.f32.mrf.mxu0
      %v2314 = vadd.f32 %v640, %v2313
      %v2315 = vpop.f32.mrf.mxu0
      %v2316 = vadd.f32 %v640, %v2315
      %2317 = vmatmul.bf16.gmra.mxu0 %v1674
      %v2318 = vpop.f32.mrf.mxu0
      %v2319 = vadd.f32 %v640, %v2318
      %v2320 = vpop.f32.mrf.mxu0
      %v2321 = vadd.f32 %v640, %v2320
      %2322 = vmatmul.bf16.gmra.mxu0 %v1677
      %v2323 = vpop.f32.mrf.mxu0
      %v2324 = vadd.f32 %v640, %v2323
      %v2325 = vpop.f32.mrf.mxu0
      %v2326 = vadd.f32 %v640, %v2325
      %2327 = vdwg.mxu0
      %v2328 = vmax.f32 %v1689, 0.0
      %v2329 = vmax.f32 %v1691, 0.0
      %v2330 = vmax.f32 %v1694, 0.0
      %v2331 = vmax.f32 %v1696, 0.0
      %v2332 = vmax.f32 %v1699, 0.0
      %v2333 = vmax.f32 %v1701, 0.0
      %v2334 = vmax.f32 %v1704, 0.0
      %v2335 = vmax.f32 %v1706, 0.0
      %v2336 = vmax.f32 %v1709, 0.0
      %v2337 = vmax.f32 %v1711, 0.0
      %v2338 = vmax.f32 %v1714, 0.0
      %v2339 = vmax.f32 %v1716, 0.0
      %v2340 = vmax.f32 %v1719, 0.0
      %v2341 = vmax.f32 %v1721, 0.0
      %v2342 = vmax.f32 %v1724, 0.0
      %v2343 = vmax.f32 %v1726, 0.0
      %v2344 = vmax.f32 %v1729, 0.0
      %v2345 = vmax.f32 %v1731, 0.0
      %v2346 = vmax.f32 %v1734, 0.0
      %v2347 = vmax.f32 %v1736, 0.0
      %v2348 = vmax.f32 %v1739, 0.0
      %v2349 = vmax.f32 %v1741, 0.0
      %v2350 = vmax.f32 %v1744, 0.0
      %v2351 = vmax.f32 %v1746, 0.0
      %v2352 = vmax.f32 %v1749, 0.0
      %v2353 = vmax.f32 %v1751, 0.0
      %v2354 = vmax.f32 %v1754, 0.0
      %v2355 = vmax.f32 %v1756, 0.0
      %v2356 = vmax.f32 %v1759, 0.0
      %v2357 = vmax.f32 %v1761, 0.0
      %v2358 = vmax.f32 %v1764, 0.0
      %v2359 = vmax.f32 %v1766, 0.0
      %v2360 = vmax.f32 %v1769, 0.0
      %v2361 = vmax.f32 %v1771, 0.0
      %v2362 = vmax.f32 %v1774, 0.0
      %v2363 = vmax.f32 %v1776, 0.0
      %v2364 = vmax.f32 %v1779, 0.0
      %v2365 = vmax.f32 %v1781, 0.0
      %v2366 = vmax.f32 %v1784, 0.0
      %v2367 = vmax.f32 %v1786, 0.0
      %v2368 = vmax.f32 %v1789, 0.0
      %v2369 = vmax.f32 %v1791, 0.0
      %v2370 = vmax.f32 %v1794, 0.0
      %v2371 = vmax.f32 %v1796, 0.0
      %v2372 = vmax.f32 %v1799, 0.0
      %v2373 = vmax.f32 %v1801, 0.0
      %v2374 = vmax.f32 %v1804, 0.0
      %v2375 = vmax.f32 %v1806, 0.0
      %v2376 = vmax.f32 %v1809, 0.0
      %v2377 = vmax.f32 %v1811, 0.0
      %v2378 = vmax.f32 %v1814, 0.0
      %v2379 = vmax.f32 %v1816, 0.0
      %v2380 = vmax.f32 %v1819, 0.0
      %v2381 = vmax.f32 %v1821, 0.0
      %v2382 = vmax.f32 %v1824, 0.0
      %v2383 = vmax.f32 %v1826, 0.0
      %v2384 = vmax.f32 %v1829, 0.0
      %v2385 = vmax.f32 %v1831, 0.0
      %v2386 = vmax.f32 %v1834, 0.0
      %v2387 = vmax.f32 %v1836, 0.0
      %v2388 = vmax.f32 %v1839, 0.0
      %v2389 = vmax.f32 %v1841, 0.0
      %v2390 = vmax.f32 %v1844, 0.0
      %v2391 = vmax.f32 %v1846, 0.0
      %v2392 = vmax.f32 %v1849, 0.0
      %v2393 = vmax.f32 %v1851, 0.0
      %v2394 = vmax.f32 %v1854, 0.0
      %v2395 = vmax.f32 %v1856, 0.0
      %v2396 = vmax.f32 %v1859, 0.0
      %v2397 = vmax.f32 %v1861, 0.0
      %v2398 = vmax.f32 %v1864, 0.0
      %v2399 = vmax.f32 %v1866, 0.0
      %v2400 = vmax.f32 %v1869, 0.0
      %v2401 = vmax.f32 %v1871, 0.0
      %v2402 = vmax.f32 %v1874, 0.0
      %v2403 = vmax.f32 %v1876, 0.0
      %v2404 = vmax.f32 %v1879, 0.0
      %v2405 = vmax.f32 %v1881, 0.0
      %v2406 = vmax.f32 %v1884, 0.0
      %v2407 = vmax.f32 %v1886, 0.0
      %v2408 = vmax.f32 %v1889, 0.0
      %v2409 = vmax.f32 %v1891, 0.0
      %v2410 = vmax.f32 %v1894, 0.0
      %v2411 = vmax.f32 %v1896, 0.0
      %v2412 = vmax.f32 %v1899, 0.0
      %v2413 = vmax.f32 %v1901, 0.0
      %v2414 = vmax.f32 %v1904, 0.0
      %v2415 = vmax.f32 %v1906, 0.0
      %v2416 = vmax.f32 %v1909, 0.0
      %v2417 = vmax.f32 %v1911, 0.0
      %v2418 = vmax.f32 %v1914, 0.0
      %v2419 = vmax.f32 %v1916, 0.0
      %v2420 = vmax.f32 %v1919, 0.0
      %v2421 = vmax.f32 %v1921, 0.0
      %v2422 = vmax.f32 %v1924, 0.0
      %v2423 = vmax.f32 %v1926, 0.0
      %v2424 = vmax.f32 %v1929, 0.0
      %v2425 = vmax.f32 %v1931, 0.0
      %v2426 = vmax.f32 %v1934, 0.0
      %v2427 = vmax.f32 %v1936, 0.0
      %v2428 = vmax.f32 %v1939, 0.0
      %v2429 = vmax.f32 %v1941, 0.0
      %v2430 = vmax.f32 %v1944, 0.0
      %v2431 = vmax.f32 %v1946, 0.0
      %v2432 = vmax.f32 %v1949, 0.0
      %v2433 = vmax.f32 %v1951, 0.0
      %v2434 = vmax.f32 %v1954, 0.0
      %v2435 = vmax.f32 %v1956, 0.0
      %v2436 = vmax.f32 %v1959, 0.0
      %v2437 = vmax.f32 %v1961, 0.0
      %v2438 = vmax.f32 %v1964, 0.0
      %v2439 = vmax.f32 %v1966, 0.0
      %v2440 = vmax.f32 %v1969, 0.0
      %v2441 = vmax.f32 %v1971, 0.0
      %v2442 = vmax.f32 %v1974, 0.0
      %v2443 = vmax.f32 %v1976, 0.0
      %v2444 = vmax.f32 %v1979, 0.0
      %v2445 = vmax.f32 %v1981, 0.0
      %v2446 = vmax.f32 %v1984, 0.0
      %v2447 = vmax.f32 %v1986, 0.0
      %v2448 = vmax.f32 %v1989, 0.0
      %v2449 = vmax.f32 %v1991, 0.0
      %v2450 = vmax.f32 %v1994, 0.0
      %v2451 = vmax.f32 %v1996, 0.0
      %v2452 = vmax.f32 %v1999, 0.0
      %v2453 = vmax.f32 %v2001, 0.0
      %v2454 = vmax.f32 %v2004, 0.0
      %v2455 = vmax.f32 %v2006, 0.0
      %v2456 = vmax.f32 %v2009, 0.0
      %v2457 = vmax.f32 %v2011, 0.0
      %v2458 = vmax.f32 %v2014, 0.0
      %v2459 = vmax.f32 %v2016, 0.0
      %v2460 = vmax.f32 %v2019, 0.0
      %v2461 = vmax.f32 %v2021, 0.0
      %v2462 = vmax.f32 %v2024, 0.0
      %v2463 = vmax.f32 %v2026, 0.0
      %v2464 = vmax.f32 %v2029, 0.0
      %v2465 = vmax.f32 %v2031, 0.0
      %v2466 = vmax.f32 %v2034, 0.0
      %v2467 = vmax.f32 %v2036, 0.0
      %v2468 = vmax.f32 %v2039, 0.0
      %v2469 = vmax.f32 %v2041, 0.0
      %v2470 = vmax.f32 %v2044, 0.0
      %v2471 = vmax.f32 %v2046, 0.0
      %v2472 = vmax.f32 %v2049, 0.0
      %v2473 = vmax.f32 %v2051, 0.0
      %v2474 = vmax.f32 %v2054, 0.0
      %v2475 = vmax.f32 %v2056, 0.0
      %v2476 = vmax.f32 %v2059, 0.0
      %v2477 = vmax.f32 %v2061, 0.0
      %v2478 = vmax.f32 %v2064, 0.0
      %v2479 = vmax.f32 %v2066, 0.0
      %v2480 = vmax.f32 %v2069, 0.0
      %v2481 = vmax.f32 %v2071, 0.0
      %v2482 = vmax.f32 %v2074, 0.0
      %v2483 = vmax.f32 %v2076, 0.0
      %v2484 = vmax.f32 %v2079, 0.0
      %v2485 = vmax.f32 %v2081, 0.0
      %v2486 = vmax.f32 %v2084, 0.0
      %v2487 = vmax.f32 %v2086, 0.0
      %v2488 = vmax.f32 %v2089, 0.0
      %v2489 = vmax.f32 %v2091, 0.0
      %v2490 = vmax.f32 %v2094, 0.0
      %v2491 = vmax.f32 %v2096, 0.0
      %v2492 = vmax.f32 %v2099, 0.0
      %v2493 = vmax.f32 %v2101, 0.0
      %v2494 = vmax.f32 %v2104, 0.0
      %v2495 = vmax.f32 %v2106, 0.0
      %v2496 = vmax.f32 %v2109, 0.0
      %v2497 = vmax.f32 %v2111, 0.0
      %v2498 = vmax.f32 %v2114, 0.0
      %v2499 = vmax.f32 %v2116, 0.0
      %v2500 = vmax.f32 %v2119, 0.0
      %v2501 = vmax.f32 %v2121, 0.0
      %v2502 = vmax.f32 %v2124, 0.0
      %v2503 = vmax.f32 %v2126, 0.0
      %v2504 = vmax.f32 %v2129, 0.0
      %v2505 = vmax.f32 %v2131, 0.0
      %v2506 = vmax.f32 %v2134, 0.0
      %v2507 = vmax.f32 %v2136, 0.0
      %v2508 = vmax.f32 %v2139, 0.0
      %v2509 = vmax.f32 %v2141, 0.0
      %v2510 = vmax.f32 %v2144, 0.0
      %v2511 = vmax.f32 %v2146, 0.0
      %v2512 = vmax.f32 %v2149, 0.0
      %v2513 = vmax.f32 %v2151, 0.0
      %v2514 = vmax.f32 %v2154, 0.0
      %v2515 = vmax.f32 %v2156, 0.0
      %v2516 = vmax.f32 %v2159, 0.0
      %v2517 = vmax.f32 %v2161, 0.0
      %v2518 = vmax.f32 %v2164, 0.0
      %v2519 = vmax.f32 %v2166, 0.0
      %v2520 = vmax.f32 %v2169, 0.0
      %v2521 = vmax.f32 %v2171, 0.0
      %v2522 = vmax.f32 %v2174, 0.0
      %v2523 = vmax.f32 %v2176, 0.0
      %v2524 = vmax.f32 %v2179, 0.0
      %v2525 = vmax.f32 %v2181, 0.0
      %v2526 = vmax.f32 %v2184, 0.0
      %v2527 = vmax.f32 %v2186, 0.0
      %v2528 = vmax.f32 %v2189, 0.0
      %v2529 = vmax.f32 %v2191, 0.0
      %v2530 = vmax.f32 %v2194, 0.0
      %v2531 = vmax.f32 %v2196, 0.0
      %v2532 = vmax.f32 %v2199, 0.0
      %v2533 = vmax.f32 %v2201, 0.0
      %v2534 = vmax.f32 %v2204, 0.0
      %v2535 = vmax.f32 %v2206, 0.0
      %v2536 = vmax.f32 %v2209, 0.0
      %v2537 = vmax.f32 %v2211, 0.0
      %v2538 = vmax.f32 %v2214, 0.0
      %v2539 = vmax.f32 %v2216, 0.0
      %v2540 = vmax.f32 %v2219, 0.0
      %v2541 = vmax.f32 %v2221, 0.0
      %v2542 = vmax.f32 %v2224, 0.0
      %v2543 = vmax.f32 %v2226, 0.0
      %v2544 = vmax.f32 %v2229, 0.0
      %v2545 = vmax.f32 %v2231, 0.0
      %v2546 = vmax.f32 %v2234, 0.0
      %v2547 = vmax.f32 %v2236, 0.0
      %v2548 = vmax.f32 %v2239, 0.0
      %v2549 = vmax.f32 %v2241, 0.0
      %v2550 = vmax.f32 %v2244, 0.0
      %v2551 = vmax.f32 %v2246, 0.0
      %v2552 = vmax.f32 %v2249, 0.0
      %v2553 = vmax.f32 %v2251, 0.0
      %v2554 = vmax.f32 %v2254, 0.0
      %v2555 = vmax.f32 %v2256, 0.0
      %v2556 = vmax.f32 %v2259, 0.0
      %v2557 = vmax.f32 %v2261, 0.0
      %v2558 = vmax.f32 %v2264, 0.0
      %v2559 = vmax.f32 %v2266, 0.0
      %v2560 = vmax.f32 %v2269, 0.0
      %v2561 = vmax.f32 %v2271, 0.0
      %v2562 = vmax.f32 %v2274, 0.0
      %v2563 = vmax.f32 %v2276, 0.0
      %v2564 = vmax.f32 %v2279, 0.0
      %v2565 = vmax.f32 %v2281, 0.0
      %v2566 = vmax.f32 %v2284, 0.0
      %v2567 = vmax.f32 %v2286, 0.0
      %v2568 = vmax.f32 %v2289, 0.0
      %v2569 = vmax.f32 %v2291, 0.0
      %v2570 = vmax.f32 %v2294, 0.0
      %v2571 = vmax.f32 %v2296, 0.0
      %v2572 = vmax.f32 %v2299, 0.0
      %v2573 = vmax.f32 %v2301, 0.0
      %v2574 = vmax.f32 %v2304, 0.0
      %v2575 = vmax.f32 %v2306, 0.0
      %v2576 = vmax.f32 %v2309, 0.0
      %v2577 = vmax.f32 %v2311, 0.0
      %v2578 = vmax.f32 %v2314, 0.0
      %v2579 = vmax.f32 %v2316, 0.0
      %v2580 = vmax.f32 %v2319, 0.0
      %v2581 = vmax.f32 %v2321, 0.0
      %v2582 = vmax.f32 %v2324, 0.0
      %v2583 = vmax.f32 %v2326, 0.0
      %v2584 = vadd.f32 %v2328, %v2329
      %v2585 = vadd.f32 %v2584, %v2330
      %v2586 = vadd.f32 %v2585, %v2331
      %v2587 = vadd.f32 %v2586, %v2332
      %v2588 = vadd.f32 %v2587, %v2333
      %v2589 = vadd.f32 %v2588, %v2334
      %v2590 = vadd.f32 %v2589, %v2335
      %v2591 = vadd.f32 %v2590, %v2336
      %v2592 = vadd.f32 %v2591, %v2337
      %v2593 = vadd.f32 %v2592, %v2338
      %v2594 = vadd.f32 %v2593, %v2339
      %v2595 = vadd.f32 %v2594, %v2340
      %v2596 = vadd.f32 %v2595, %v2341
      %v2597 = vadd.f32 %v2596, %v2342
      %v2598 = vadd.f32 %v2597, %v2343
      %v2599 = vadd.f32 %v2598, %v2344
      %v2600 = vadd.f32 %v2599, %v2345
      %v2601 = vadd.f32 %v2600, %v2346
      %v2602 = vadd.f32 %v2601, %v2347
      %v2603 = vadd.f32 %v2602, %v2348
      %v2604 = vadd.f32 %v2603, %v2349
      %v2605 = vadd.f32 %v2604, %v2350
      %v2606 = vadd.f32 %v2605, %v2351
      %v2607 = vadd.f32 %v2606, %v2352
      %v2608 = vadd.f32 %v2607, %v2353
      %v2609 = vadd.f32 %v2608, %v2354
      %v2610 = vadd.f32 %v2609, %v2355
      %v2611 = vadd.f32 %v2610, %v2356
      %v2612 = vadd.f32 %v2611, %v2357
      %v2613 = vadd.f32 %v2612, %v2358
      %v2614 = vadd.f32 %v2613, %v2359
      %v2615 = vrot.slane %v2614, 4
      %v2616 = vadd.f32 %v2614, %v2615
      %v2617 = vrot.slane %v2616, 2
      %v2618 = vadd.f32 %v2616, %v2617
      %v2619 = vrot.slane %v2618, 1
      %v2620 = vadd.f32 %v2618, %v2619
      %v2621 = vadd.f32 %v2360, %v2361
      %v2622 = vadd.f32 %v2621, %v2362
      %v2623 = vadd.f32 %v2622, %v2363
      %v2624 = vadd.f32 %v2623, %v2364
      %v2625 = vadd.f32 %v2624, %v2365
      %v2626 = vadd.f32 %v2625, %v2366
      %v2627 = vadd.f32 %v2626, %v2367
      %v2628 = vadd.f32 %v2627, %v2368
      %v2629 = vadd.f32 %v2628, %v2369
      %v2630 = vadd.f32 %v2629, %v2370
      %v2631 = vadd.f32 %v2630, %v2371
      %v2632 = vadd.f32 %v2631, %v2372
      %v2633 = vadd.f32 %v2632, %v2373
      %v2634 = vadd.f32 %v2633, %v2374
      %v2635 = vadd.f32 %v2634, %v2375
      %v2636 = vadd.f32 %v2635, %v2376
      %v2637 = vadd.f32 %v2636, %v2377
      %v2638 = vadd.f32 %v2637, %v2378
      %v2639 = vadd.f32 %v2638, %v2379
      %v2640 = vadd.f32 %v2639, %v2380
      %v2641 = vadd.f32 %v2640, %v2381
      %v2642 = vadd.f32 %v2641, %v2382
      %v2643 = vadd.f32 %v2642, %v2383
      %v2644 = vadd.f32 %v2643, %v2384
      %v2645 = vadd.f32 %v2644, %v2385
      %v2646 = vadd.f32 %v2645, %v2386
      %v2647 = vadd.f32 %v2646, %v2387
      %v2648 = vadd.f32 %v2647, %v2388
      %v2649 = vadd.f32 %v2648, %v2389
      %v2650 = vadd.f32 %v2649, %v2390
      %v2651 = vadd.f32 %v2650, %v2391
      %v2652 = vrot.slane %v2651, 4
      %v2653 = vadd.f32 %v2651, %v2652
      %v2654 = vrot.slane %v2653, 2
      %v2655 = vadd.f32 %v2653, %v2654
      %v2656 = vrot.slane %v2655, 1
      %v2657 = vadd.f32 %v2655, %v2656
      %v2658 = vadd.f32 %v2392, %v2393
      %v2659 = vadd.f32 %v2658, %v2394
      %v2660 = vadd.f32 %v2659, %v2395
      %v2661 = vadd.f32 %v2660, %v2396
      %v2662 = vadd.f32 %v2661, %v2397
      %v2663 = vadd.f32 %v2662, %v2398
      %v2664 = vadd.f32 %v2663, %v2399
      %v2665 = vadd.f32 %v2664, %v2400
      %v2666 = vadd.f32 %v2665, %v2401
      %v2667 = vadd.f32 %v2666, %v2402
      %v2668 = vadd.f32 %v2667, %v2403
      %v2669 = vadd.f32 %v2668, %v2404
      %v2670 = vadd.f32 %v2669, %v2405
      %v2671 = vadd.f32 %v2670, %v2406
      %v2672 = vadd.f32 %v2671, %v2407
      %v2673 = vadd.f32 %v2672, %v2408
      %v2674 = vadd.f32 %v2673, %v2409
      %v2675 = vadd.f32 %v2674, %v2410
      %v2676 = vadd.f32 %v2675, %v2411
      %v2677 = vadd.f32 %v2676, %v2412
      %v2678 = vadd.f32 %v2677, %v2413
      %v2679 = vadd.f32 %v2678, %v2414
      %v2680 = vadd.f32 %v2679, %v2415
      %v2681 = vadd.f32 %v2680, %v2416
      %v2682 = vadd.f32 %v2681, %v2417
      %v2683 = vadd.f32 %v2682, %v2418
      %v2684 = vadd.f32 %v2683, %v2419
      %v2685 = vadd.f32 %v2684, %v2420
      %v2686 = vadd.f32 %v2685, %v2421
      %v2687 = vadd.f32 %v2686, %v2422
      %v2688 = vadd.f32 %v2687, %v2423
      %v2689 = vrot.slane %v2688, 4
      %v2690 = vadd.f32 %v2688, %v2689
      %v2691 = vrot.slane %v2690, 2
      %v2692 = vadd.f32 %v2690, %v2691
      %v2693 = vrot.slane %v2692, 1
      %v2694 = vadd.f32 %v2692, %v2693
      %v2695 = vadd.f32 %v2424, %v2425
      %v2696 = vadd.f32 %v2695, %v2426
      %v2697 = vadd.f32 %v2696, %v2427
      %v2698 = vadd.f32 %v2697, %v2428
      %v2699 = vadd.f32 %v2698, %v2429
      %v2700 = vadd.f32 %v2699, %v2430
      %v2701 = vadd.f32 %v2700, %v2431
      %v2702 = vadd.f32 %v2701, %v2432
      %v2703 = vadd.f32 %v2702, %v2433
      %v2704 = vadd.f32 %v2703, %v2434
      %v2705 = vadd.f32 %v2704, %v2435
      %v2706 = vadd.f32 %v2705, %v2436
      %v2707 = vadd.f32 %v2706, %v2437
      %v2708 = vadd.f32 %v2707, %v2438
      %v2709 = vadd.f32 %v2708, %v2439
      %v2710 = vadd.f32 %v2709, %v2440
      %v2711 = vadd.f32 %v2710, %v2441
      %v2712 = vadd.f32 %v2711, %v2442
      %v2713 = vadd.f32 %v2712, %v2443
      %v2714 = vadd.f32 %v2713, %v2444
      %v2715 = vadd.f32 %v2714, %v2445
      %v2716 = vadd.f32 %v2715, %v2446
      %v2717 = vadd.f32 %v2716, %v2447
      %v2718 = vadd.f32 %v2717, %v2448
      %v2719 = vadd.f32 %v2718, %v2449
      %v2720 = vadd.f32 %v2719, %v2450
      %v2721 = vadd.f32 %v2720, %v2451
      %v2722 = vadd.f32 %v2721, %v2452
      %v2723 = vadd.f32 %v2722, %v2453
      %v2724 = vadd.f32 %v2723, %v2454
      %v2725 = vadd.f32 %v2724, %v2455
      %v2726 = vrot.slane %v2725, 4
      %v2727 = vadd.f32 %v2725, %v2726
      %v2728 = vrot.slane %v2727, 2
      %v2729 = vadd.f32 %v2727, %v2728
      %v2730 = vrot.slane %v2729, 1
      %v2731 = vadd.f32 %v2729, %v2730
      %v2732 = vadd.f32 %v2456, %v2457
      %v2733 = vadd.f32 %v2732, %v2458
      %v2734 = vadd.f32 %v2733, %v2459
      %v2735 = vadd.f32 %v2734, %v2460
      %v2736 = vadd.f32 %v2735, %v2461
      %v2737 = vadd.f32 %v2736, %v2462
      %v2738 = vadd.f32 %v2737, %v2463
      %v2739 = vadd.f32 %v2738, %v2464
      %v2740 = vadd.f32 %v2739, %v2465
      %v2741 = vadd.f32 %v2740, %v2466
      %v2742 = vadd.f32 %v2741, %v2467
      %v2743 = vadd.f32 %v2742, %v2468
      %v2744 = vadd.f32 %v2743, %v2469
      %v2745 = vadd.f32 %v2744, %v2470
      %v2746 = vadd.f32 %v2745, %v2471
      %v2747 = vadd.f32 %v2746, %v2472
      %v2748 = vadd.f32 %v2747, %v2473
      %v2749 = vadd.f32 %v2748, %v2474
      %v2750 = vadd.f32 %v2749, %v2475
      %v2751 = vadd.f32 %v2750, %v2476
      %v2752 = vadd.f32 %v2751, %v2477
      %v2753 = vadd.f32 %v2752, %v2478
      %v2754 = vadd.f32 %v2753, %v2479
      %v2755 = vadd.f32 %v2754, %v2480
      %v2756 = vadd.f32 %v2755, %v2481
      %v2757 = vadd.f32 %v2756, %v2482
      %v2758 = vadd.f32 %v2757, %v2483
      %v2759 = vadd.f32 %v2758, %v2484
      %v2760 = vadd.f32 %v2759, %v2485
      %v2761 = vadd.f32 %v2760, %v2486
      %v2762 = vadd.f32 %v2761, %v2487
      %v2763 = vrot.slane %v2762, 4
      %v2764 = vadd.f32 %v2762, %v2763
      %v2765 = vrot.slane %v2764, 2
      %v2766 = vadd.f32 %v2764, %v2765
      %v2767 = vrot.slane %v2766, 1
      %v2768 = vadd.f32 %v2766, %v2767
      %v2769 = vadd.f32 %v2488, %v2489
      %v2770 = vadd.f32 %v2769, %v2490
      %v2771 = vadd.f32 %v2770, %v2491
      %v2772 = vadd.f32 %v2771, %v2492
      %v2773 = vadd.f32 %v2772, %v2493
      %v2774 = vadd.f32 %v2773, %v2494
      %v2775 = vadd.f32 %v2774, %v2495
      %v2776 = vadd.f32 %v2775, %v2496
      %v2777 = vadd.f32 %v2776, %v2497
      %v2778 = vadd.f32 %v2777, %v2498
      %v2779 = vadd.f32 %v2778, %v2499
      %v2780 = vadd.f32 %v2779, %v2500
      %v2781 = vadd.f32 %v2780, %v2501
      %v2782 = vadd.f32 %v2781, %v2502
      %v2783 = vadd.f32 %v2782, %v2503
      %v2784 = vadd.f32 %v2783, %v2504
      %v2785 = vadd.f32 %v2784, %v2505
      %v2786 = vadd.f32 %v2785, %v2506
      %v2787 = vadd.f32 %v2786, %v2507
      %v2788 = vadd.f32 %v2787, %v2508
      %v2789 = vadd.f32 %v2788, %v2509
      %v2790 = vadd.f32 %v2789, %v2510
      %v2791 = vadd.f32 %v2790, %v2511
      %v2792 = vadd.f32 %v2791, %v2512
      %v2793 = vadd.f32 %v2792, %v2513
      %v2794 = vadd.f32 %v2793, %v2514
      %v2795 = vadd.f32 %v2794, %v2515
      %v2796 = vadd.f32 %v2795, %v2516
      %v2797 = vadd.f32 %v2796, %v2517
      %v2798 = vadd.f32 %v2797, %v2518
      %v2799 = vadd.f32 %v2798, %v2519
      %v2800 = vrot.slane %v2799, 4
      %v2801 = vadd.f32 %v2799, %v2800
      %v2802 = vrot.slane %v2801, 2
      %v2803 = vadd.f32 %v2801, %v2802
      %v2804 = vrot.slane %v2803, 1
      %v2805 = vadd.f32 %v2803, %v2804
      %v2806 = vadd.f32 %v2520, %v2521
      %v2807 = vadd.f32 %v2806, %v2522
      %v2808 = vadd.f32 %v2807, %v2523
      %v2809 = vadd.f32 %v2808, %v2524
      %v2810 = vadd.f32 %v2809, %v2525
      %v2811 = vadd.f32 %v2810, %v2526
      %v2812 = vadd.f32 %v2811, %v2527
      %v2813 = vadd.f32 %v2812, %v2528
      %v2814 = vadd.f32 %v2813, %v2529
      %v2815 = vadd.f32 %v2814, %v2530
      %v2816 = vadd.f32 %v2815, %v2531
      %v2817 = vadd.f32 %v2816, %v2532
      %v2818 = vadd.f32 %v2817, %v2533
      %v2819 = vadd.f32 %v2818, %v2534
      %v2820 = vadd.f32 %v2819, %v2535
      %v2821 = vadd.f32 %v2820, %v2536
      %v2822 = vadd.f32 %v2821, %v2537
      %v2823 = vadd.f32 %v2822, %v2538
      %v2824 = vadd.f32 %v2823, %v2539
      %v2825 = vadd.f32 %v2824, %v2540
      %v2826 = vadd.f32 %v2825, %v2541
      %v2827 = vadd.f32 %v2826, %v2542
      %v2828 = vadd.f32 %v2827, %v2543
      %v2829 = vadd.f32 %v2828, %v2544
      %v2830 = vadd.f32 %v2829, %v2545
      %v2831 = vadd.f32 %v2830, %v2546
      %v2832 = vadd.f32 %v2831, %v2547
      %v2833 = vadd.f32 %v2832, %v2548
      %v2834 = vadd.f32 %v2833, %v2549
      %v2835 = vadd.f32 %v2834, %v2550
      %v2836 = vadd.f32 %v2835, %v2551
      %v2837 = vrot.slane %v2836, 4
      %v2838 = vadd.f32 %v2836, %v2837
      %v2839 = vrot.slane %v2838, 2
      %v2840 = vadd.f32 %v2838, %v2839
      %v2841 = vrot.slane %v2840, 1
      %v2842 = vadd.f32 %v2840, %v2841
      %v2843 = vadd.f32 %v2552, %v2553
      %v2844 = vadd.f32 %v2843, %v2554
      %v2845 = vadd.f32 %v2844, %v2555
      %v2846 = vadd.f32 %v2845, %v2556
      %v2847 = vadd.f32 %v2846, %v2557
      %v2848 = vadd.f32 %v2847, %v2558
      %v2849 = vadd.f32 %v2848, %v2559
      %v2850 = vadd.f32 %v2849, %v2560
      %v2851 = vadd.f32 %v2850, %v2561
      %v2852 = vadd.f32 %v2851, %v2562
      %v2853 = vadd.f32 %v2852, %v2563
      %v2854 = vadd.f32 %v2853, %v2564
      %v2855 = vadd.f32 %v2854, %v2565
      %v2856 = vadd.f32 %v2855, %v2566
      %v2857 = vadd.f32 %v2856, %v2567
      %v2858 = vadd.f32 %v2857, %v2568
      %v2859 = vadd.f32 %v2858, %v2569
      %v2860 = vadd.f32 %v2859, %v2570
      %v2861 = vadd.f32 %v2860, %v2571
      %v2862 = vadd.f32 %v2861, %v2572
      %v2863 = vadd.f32 %v2862, %v2573
      %v2864 = vadd.f32 %v2863, %v2574
      %v2865 = vadd.f32 %v2864, %v2575
      %v2866 = vadd.f32 %v2865, %v2576
      %v2867 = vadd.f32 %v2866, %v2577
      %v2868 = vadd.f32 %v2867, %v2578
      %v2869 = vadd.f32 %v2868, %v2579
      %v2870 = vadd.f32 %v2869, %v2580
      %v2871 = vadd.f32 %v2870, %v2581
      %v2872 = vadd.f32 %v2871, %v2582
      %v2873 = vadd.f32 %v2872, %v2583
      %v2874 = vrot.slane %v2873, 4
      %v2875 = vadd.f32 %v2873, %v2874
      %v2876 = vrot.slane %v2875, 2
      %v2877 = vadd.f32 %v2875, %v2876
      %v2878 = vrot.slane %v2877, 1
      %v2879 = vadd.f32 %v2877, %v2878
      %v2880 = vrcp.pop 256.0
      %v2881 = vmul.f32 256.0, %v2880
      %v2882 = vsub.f32 1.0, %v2881
      %v2883 = vmul.f32 %v2880, %v2882
      %v2884 = vadd.f32 %v2880, %v2883
      %vm2885 = vweird.f32 %v2880
      %v2886 = vsel %vm2885, %v2880, %v2884
      %v2887 = vmul.f32 %v2620, %v2886
      %v2888 = vmul.f32 %v2657, %v2886
      %v2889 = vmul.f32 %v2694, %v2886
      %v2890 = vmul.f32 %v2731, %v2886
      %v2891 = vmul.f32 %v2768, %v2886
      %v2892 = vmul.f32 %v2805, %v2886
      %v2893 = vmul.f32 %v2842, %v2886
      %v2894 = vmul.f32 %v2879, %v2886
      %v2895 = vld [vmem:[%s372] sm:$0xff]
      %v2897 = vrot.slane %v2895, 1
      %v2898 = vrot.slane %v2895, 2
      %v2899 = vrot.slane %v2895, 3
      %v2900 = vrot.slane %v2895, 4
      %v2901 = vrot.slane %v2895, 5
      %v2902 = vrot.slane %v2895, 6
      %v2903 = vrot.slane %v2895, 7
      %v2912 = vadd.f32 %v2887, %v2895
      %v2913 = vadd.f32 %v2888, %v2897
      %v2914 = vadd.f32 %v2889, %v2898
      %v2915 = vadd.f32 %v2890, %v2899
      %v2916 = vadd.f32 %v2891, %v2900
      %v2917 = vadd.f32 %v2892, %v2901
      %v2918 = vadd.f32 %v2893, %v2902
      %v2919 = vadd.f32 %v2894, %v2903
      %v2920 = vpack.c.bf16 %v2912, %v2912
      %v2921 = vpack.c.bf16 %v2913, %v2913
      %v2922 = vpack.c.bf16 %v2914, %v2914
      %v2923 = vpack.c.bf16 %v2915, %v2915
      %v2924 = vpack.c.bf16 %v2916, %v2916
      %v2925 = vpack.c.bf16 %v2917, %v2917
      %v2926 = vpack.c.bf16 %v2918, %v2918
      %v2927 = vpack.c.bf16 %v2919, %v2919
      %v2928 = vld [vmem:[%s4] sm:$0xff]
      %v2929 = vld [vmem:[%s4 + $0x8] sm:$0xff]
      %v2930 = vld [vmem:[%s4 + $0x10] sm:$0xff]
      %v2931 = vld [vmem:[%s4 + $0x18] sm:$0xff]
      %v2932 = vld [vmem:[%s4 + $0x20] sm:$0xff]
      %v2933 = vld [vmem:[%s4 + $0x28] sm:$0xff]
      %v2934 = vld [vmem:[%s4 + $0x30] sm:$0xff]
      %v2935 = vld [vmem:[%s4 + $0x38] sm:$0xff]
      %v2936 = vld [vmem:[%s4 + $0x40] sm:$0xff]
      %v2937 = vld [vmem:[%s4 + $0x48] sm:$0xff]
      %v2938 = vld [vmem:[%s4 + $0x50] sm:$0xff]
      %v2939 = vld [vmem:[%s4 + $0x58] sm:$0xff]
      %v2940 = vld [vmem:[%s4 + $0x60] sm:$0xff]
      %v2941 = vld [vmem:[%s4 + $0x68] sm:$0xff]
      %v2942 = vld [vmem:[%s4 + $0x70] sm:$0xff]
      %v2943 = vld [vmem:[%s4 + $0x78] sm:$0xff]
      %v2944 = vld [vmem:[%s5] sm:$0x3]
      %v2946 = vperm.slane %v2944, 0
      %v2947 = vperm.slane %v2944, 1
      %v2958 = vunpack.c.l.b16 %v2920
      %v2959 = vunpack.c.l.b16 %v2921
      %v2960 = vunpack.c.l.b16 %v2922
      %v2961 = vunpack.c.l.b16 %v2923
      %v2962 = vunpack.c.l.b16 %v2924
      %v2963 = vunpack.c.l.b16 %v2925
      %v2964 = vunpack.c.l.b16 %v2926
      %v2965 = vunpack.c.l.b16 %v2927
      %v2966 = vrot.slane %v2959, 7
      %vm2967 = vcmask 1041409
      %v2968 = vsel %vm2967, %v2966, %v2958
      %v2969 = vrot.slane %v2960, 6
      %vm2970 = vcmask 1042434
      %v2971 = vsel %vm2970, %v2969, %v2968
      %v2972 = vrot.slane %v2961, 5
      %vm2973 = vcmask 1043459
      %v2974 = vsel %vm2973, %v2972, %v2971
      %v2975 = vrot.slane %v2962, 4
      %vm2976 = vcmask 1044484
      %v2977 = vsel %vm2976, %v2975, %v2974
      %v2978 = vrot.slane %v2963, 3
      %vm2979 = vcmask 1045509
      %v2980 = vsel %vm2979, %v2978, %v2977
      %v2981 = vrot.slane %v2964, 2
      %vm2982 = vcmask 1046534
      %v2983 = vsel %vm2982, %v2981, %v2980
      %v2984 = vrot.slane %v2965, 1
      %vm2985 = vcmask 1047559
      %v2986 = vsel %vm2985, %v2984, %v2983
      %v2987 = vpack.c.b16 %v2986, %v2986
      %v3005 = vunpack.c.l.b16 %v2928
      %v3006 = vunpack.c.h.b16 %v2928
      %v3007 = vunpack.c.l.b16 %v2929
      %v3008 = vunpack.c.h.b16 %v2929
      %v3009 = vunpack.c.l.b16 %v2930
      %v3010 = vunpack.c.h.b16 %v2930
      %v3011 = vunpack.c.l.b16 %v2931
      %v3012 = vunpack.c.h.b16 %v2931
      %v3013 = vunpack.c.l.b16 %v2932
      %v3014 = vunpack.c.h.b16 %v2932
      %v3015 = vunpack.c.l.b16 %v2933
      %v3016 = vunpack.c.h.b16 %v2933
      %v3017 = vunpack.c.l.b16 %v2934
      %v3018 = vunpack.c.h.b16 %v2934
      %v3019 = vunpack.c.l.b16 %v2935
      %v3020 = vunpack.c.h.b16 %v2935
      %v3021 = vunpack.c.l.b16 %v2936
      %v3022 = vunpack.c.h.b16 %v2936
      %v3023 = vunpack.c.l.b16 %v2937
      %v3024 = vunpack.c.h.b16 %v2937
      %v3025 = vunpack.c.l.b16 %v2938
      %v3026 = vunpack.c.h.b16 %v2938
      %v3027 = vunpack.c.l.b16 %v2939
      %v3028 = vunpack.c.h.b16 %v2939
      %v3029 = vunpack.c.l.b16 %v2940
      %v3030 = vunpack.c.h.b16 %v2940
      %v3031 = vunpack.c.l.b16 %v2941
      %v3032 = vunpack.c.h.b16 %v2941
      %v3033 = vunpack.c.l.b16 %v2942
      %v3034 = vunpack.c.h.b16 %v2942
      %v3035 = vunpack.c.l.b16 %v2943
      %v3036 = vunpack.c.h.b16 %v2943
      %v3037 = vpack.c.b16 %v3007, %v3005
      %v3038 = vpack.c.b16 %v3008, %v3006
      %v3039 = vpack.c.b16 %v3011, %v3009
      %v3040 = vpack.c.b16 %v3012, %v3010
      %v3041 = vpack.c.b16 %v3015, %v3013
      %v3042 = vpack.c.b16 %v3016, %v3014
      %v3043 = vpack.c.b16 %v3019, %v3017
      %v3044 = vpack.c.b16 %v3020, %v3018
      %v3045 = vpack.c.b16 %v3023, %v3021
      %v3046 = vpack.c.b16 %v3024, %v3022
      %v3047 = vpack.c.b16 %v3027, %v3025
      %v3048 = vpack.c.b16 %v3028, %v3026
      %v3049 = vpack.c.b16 %v3031, %v3029
      %v3050 = vpack.c.b16 %v3032, %v3030
      %v3051 = vpack.c.b16 %v3035, %v3033
      %v3052 = vpack.c.b16 %v3036, %v3034
      %3069 = vmatpush.bf16.msra.mxu0 %v3051
      %3070 = vmatpush.bf16.msra.mxu0 %v3049
      %3071 = vmatpush.bf16.msra.mxu0 %v3047
      %3072 = vmatpush.bf16.msra.mxu0 %v3045
      %3073 = vmatpush.bf16.msra.mxu0 %v3043
      %3074 = vmatpush.bf16.msra.mxu0 %v3041
      %3075 = vmatpush.bf16.msra.mxu0 %v3039
      %3076 = vmatpush.bf16.msra.mxu0 %v3037
      %3077 = vmatmul.bf16.gmra.mxu0 %v2987
      %v3078 = vpop.f32.mrf.mxu0
      %v3079 = vadd.f32 %v2946, %v3078
      %v3080 = vpop.f32.mrf.mxu0
      %3081 = vdwg.mxu0
      %3082 = vmatpush.bf16.msra.mxu0 %v3052
      %3083 = vmatpush.bf16.msra.mxu0 %v3050
      %3084 = vmatpush.bf16.msra.mxu0 %v3048
      %3085 = vmatpush.bf16.msra.mxu0 %v3046
      %3086 = vmatpush.bf16.msra.mxu0 %v3044
      %3087 = vmatpush.bf16.msra.mxu0 %v3042
      %3088 = vmatpush.bf16.msra.mxu0 %v3040
      %3089 = vmatpush.bf16.msra.mxu0 %v3038
      %3090 = vmatmul.bf16.gmra.mxu0 %v2987
      %v3091 = vpop.f32.mrf.mxu0
      %v3092 = vadd.f32 %v2947, %v3091
      %v3093 = vpop.f32.mrf.mxu0
      %3094 = vdwg.mxu0
      %v3095 = vmax.f32 %v3079, 0.0
      %v3096 = vmax.f32 %v3092, 0.0
      %v3097 = vpack.c.bf16 %v3095, %v3095
      %v3098 = vpack.c.bf16 %v3096, %v3096
      %v3099 = vld [vmem:[%s6] sm:$0xf]
      %v3100 = vld [vmem:[%s6 + $0x4] sm:$0xf]
      %v3101 = vld [vmem:[%s6 + $0x8] sm:$0xf]
      %v3102 = vld [vmem:[%s6 + $0xc] sm:$0xf]
      %v3103 = vld [vmem:[%s6 + $0x10] sm:$0xf]
      %v3104 = vld [vmem:[%s6 + $0x14] sm:$0xf]
      %v3105 = vld [vmem:[%s6 + $0x18] sm:$0xf]
      %v3106 = vld [vmem:[%s6 + $0x1c] sm:$0xf]
      %v3107 = vld [vmem:[%s6 + $0x20] sm:$0xf]
      %v3108 = vld [vmem:[%s6 + $0x24] sm:$0xf]
      %v3109 = vld [vmem:[%s6 + $0x28] sm:$0xf]
      %v3110 = vld [vmem:[%s6 + $0x2c] sm:$0xf]
      %v3111 = vld [vmem:[%s6 + $0x30] sm:$0xf]
      %v3112 = vld [vmem:[%s6 + $0x34] sm:$0xf]
      %v3113 = vld [vmem:[%s6 + $0x38] sm:$0xf]
      %v3114 = vld [vmem:[%s6 + $0x3c] sm:$0xf]
      %v3115 = vld [vmem:[%s6 + $0x40] sm:$0xf]
      %v3116 = vld [vmem:[%s6 + $0x44] sm:$0xf]
      %v3117 = vld [vmem:[%s6 + $0x48] sm:$0xf]
      %v3118 = vld [vmem:[%s6 + $0x4c] sm:$0xf]
      %v3119 = vld [vmem:[%s6 + $0x50] sm:$0xf]
      %v3120 = vld [vmem:[%s6 + $0x54] sm:$0xf]
      %v3121 = vld [vmem:[%s6 + $0x58] sm:$0xf]
      %v3122 = vld [vmem:[%s6 + $0x5c] sm:$0xf]
      %v3123 = vld [vmem:[%s6 + $0x60] sm:$0xf]
      %v3124 = vld [vmem:[%s6 + $0x64] sm:$0xf]
      %v3125 = vld [vmem:[%s6 + $0x68] sm:$0xf]
      %v3126 = vld [vmem:[%s6 + $0x6c] sm:$0xf]
      %v3127 = vld [vmem:[%s6 + $0x70] sm:$0xf]
      %v3128 = vld [vmem:[%s6 + $0x74] sm:$0xf]
      %v3129 = vld [vmem:[%s6 + $0x78] sm:$0xf]
      %v3130 = vld [vmem:[%s6 + $0x7c] sm:$0xf]
      %v3131 = vld [vmem:[%s7] sm:$0x1]
      %v3133 = vperm.slane %v3131, 0
      %v3167 = vunpack.c.l.b16 %v3099
      %v3168 = vunpack.c.l.b16 %v3100
      %v3169 = vunpack.c.l.b16 %v3101
      %v3170 = vunpack.c.l.b16 %v3102
      %v3171 = vunpack.c.l.b16 %v3103
      %v3172 = vunpack.c.l.b16 %v3104
      %v3173 = vunpack.c.l.b16 %v3105
      %v3174 = vunpack.c.l.b16 %v3106
      %v3175 = vunpack.c.l.b16 %v3107
      %v3176 = vunpack.c.l.b16 %v3108
      %v3177 = vunpack.c.l.b16 %v3109
      %v3178 = vunpack.c.l.b16 %v3110
      %v3179 = vunpack.c.l.b16 %v3111
      %v3180 = vunpack.c.l.b16 %v3112
      %v3181 = vunpack.c.l.b16 %v3113
      %v3182 = vunpack.c.l.b16 %v3114
      %v3183 = vunpack.c.l.b16 %v3115
      %v3184 = vunpack.c.l.b16 %v3116
      %v3185 = vunpack.c.l.b16 %v3117
      %v3186 = vunpack.c.l.b16 %v3118
      %v3187 = vunpack.c.l.b16 %v3119
      %v3188 = vunpack.c.l.b16 %v3120
      %v3189 = vunpack.c.l.b16 %v3121
      %v3190 = vunpack.c.l.b16 %v3122
      %v3191 = vunpack.c.l.b16 %v3123
      %v3192 = vunpack.c.l.b16 %v3124
      %v3193 = vunpack.c.l.b16 %v3125
      %v3194 = vunpack.c.l.b16 %v3126
      %v3195 = vunpack.c.l.b16 %v3127
      %v3196 = vunpack.c.l.b16 %v3128
      %v3197 = vunpack.c.l.b16 %v3129
      %v3198 = vunpack.c.l.b16 %v3130
      %v3199 = vpack.c.b16 %v3168, %v3167
      %v3200 = vpack.c.b16 %v3170, %v3169
      %v3201 = vpack.c.b16 %v3172, %v3171
      %v3202 = vpack.c.b16 %v3174, %v3173
      %v3203 = vpack.c.b16 %v3176, %v3175
      %v3204 = vpack.c.b16 %v3178, %v3177
      %v3205 = vpack.c.b16 %v3180, %v3179
      %v3206 = vpack.c.b16 %v3182, %v3181
      %v3207 = vpack.c.b16 %v3184, %v3183
      %v3208 = vpack.c.b16 %v3186, %v3185
      %v3209 = vpack.c.b16 %v3188, %v3187
      %v3210 = vpack.c.b16 %v3190, %v3189
      %v3211 = vpack.c.b16 %v3192, %v3191
      %v3212 = vpack.c.b16 %v3194, %v3193
      %v3213 = vpack.c.b16 %v3196, %v3195
      %v3214 = vpack.c.b16 %v3198, %v3197
      %3231 = vmatpush.bf16.msra.mxu0 %v3206
      %3232 = vmatpush.bf16.msra.mxu0 %v3205
      %3233 = vmatpush.bf16.msra.mxu0 %v3204
      %3234 = vmatpush.bf16.msra.mxu0 %v3203
      %3235 = vmatpush.bf16.msra.mxu0 %v3202
      %3236 = vmatpush.bf16.msra.mxu0 %v3201
      %3237 = vmatpush.bf16.msra.mxu0 %v3200
      %3238 = vmatpush.bf16.msra.mxu0 %v3199
      %3239 = vmatmul.bf16.gmra.mxu0 %v3097
      %v3240 = vpop.f32.mrf.mxu0
      %v3241 = vadd.f32 %v3133, %v3240
      %v3242 = vpop.f32.mrf.mxu0
      %3243 = vdwg.mxu0
      %3244 = vmatpush.bf16.msra.mxu0 %v3214
      %3245 = vmatpush.bf16.msra.mxu0 %v3213
      %3246 = vmatpush.bf16.msra.mxu0 %v3212
      %3247 = vmatpush.bf16.msra.mxu0 %v3211
      %3248 = vmatpush.bf16.msra.mxu0 %v3210
      %3249 = vmatpush.bf16.msra.mxu0 %v3209
      %3250 = vmatpush.bf16.msra.mxu0 %v3208
      %3251 = vmatpush.bf16.msra.mxu0 %v3207
      %3252 = vmatmul.bf16.gmra.mxu0 %v3098
      %v3253 = vpop.f32.mrf.mxu0
      %v3254 = vadd.f32 %v3241, %v3253
      %v3255 = vpop.f32.mrf.mxu0
      %3256 = vdwg.mxu0
      %v3257 = vmax.f32 %v3254, 0.0
      %v3258 = vpack.c.bf16 %v3257, %v3257
      %v3259 = vld [vmem:[%s8] sm:$0xf]
      %v3260 = vld [vmem:[%s8 + $0x4] sm:$0xf]
      %v3261 = vld [vmem:[%s8 + $0x8] sm:$0xf]
      %v3262 = vld [vmem:[%s8 + $0xc] sm:$0xf]
      %v3263 = vld [vmem:[%s8 + $0x10] sm:$0xf]
      %v3264 = vld [vmem:[%s8 + $0x14] sm:$0xf]
      %v3265 = vld [vmem:[%s8 + $0x18] sm:$0xf]
      %v3266 = vld [vmem:[%s8 + $0x1c] sm:$0xf]
      %v3267 = vld [vmem:[%s8 + $0x20] sm:$0xf]
      %v3268 = vld [vmem:[%s8 + $0x24] sm:$0xf]
      %v3269 = vld [vmem:[%s8 + $0x28] sm:$0xf]
      %v3270 = vld [vmem:[%s8 + $0x2c] sm:$0xf]
      %v3271 = vld [vmem:[%s8 + $0x30] sm:$0xf]
      %v3272 = vld [vmem:[%s8 + $0x34] sm:$0xf]
      %v3273 = vld [vmem:[%s8 + $0x38] sm:$0xf]
      %v3274 = vld [vmem:[%s8 + $0x3c] sm:$0xf]
      %v3275 = vld [vmem:[%s9] sm:$0x1]
      %v3277 = vperm.slane %v3275, 0
      %v3295 = vunpack.c.l.b16 %v3259
      %v3296 = vunpack.c.l.b16 %v3260
      %v3297 = vunpack.c.l.b16 %v3261
      %v3298 = vunpack.c.l.b16 %v3262
      %v3299 = vunpack.c.l.b16 %v3263
      %v3300 = vunpack.c.l.b16 %v3264
      %v3301 = vunpack.c.l.b16 %v3265
      %v3302 = vunpack.c.l.b16 %v3266
      %v3303 = vunpack.c.l.b16 %v3267
      %v3304 = vunpack.c.l.b16 %v3268
      %v3305 = vunpack.c.l.b16 %v3269
      %v3306 = vunpack.c.l.b16 %v3270
      %v3307 = vunpack.c.l.b16 %v3271
      %v3308 = vunpack.c.l.b16 %v3272
      %v3309 = vunpack.c.l.b16 %v3273
      %v3310 = vunpack.c.l.b16 %v3274
      %v3311 = vpack.c.b16 %v3296, %v3295
      %v3312 = vpack.c.b16 %v3298, %v3297
      %v3313 = vpack.c.b16 %v3300, %v3299
      %v3314 = vpack.c.b16 %v3302, %v3301
      %v3315 = vpack.c.b16 %v3304, %v3303
      %v3316 = vpack.c.b16 %v3306, %v3305
      %v3317 = vpack.c.b16 %v3308, %v3307
      %v3318 = vpack.c.b16 %v3310, %v3309
      %3327 = vmatpush.bf16.msra.mxu0 %v3318
      %3328 = vmatpush.bf16.msra.mxu0 %v3317
      %3329 = vmatpush.bf16.msra.mxu0 %v3316
      %3330 = vmatpush.bf16.msra.mxu0 %v3315
      %3331 = vmatpush.bf16.msra.mxu0 %v3314
      %3332 = vmatpush.bf16.msra.mxu0 %v3313
      %3333 = vmatpush.bf16.msra.mxu0 %v3312
      %3334 = vmatpush.bf16.msra.mxu0 %v3311
      %3335 = vmatmul.bf16.gmra.mxu0 %v3258
      %v3336 = vpop.f32.mrf.mxu0
      %v3337 = vadd.f32 %v3277, %v3336
      %v3338 = vpop.f32.mrf.mxu0
      %3339 = vdwg.mxu0
      %3340 = vst [vmem:[%s376] sm:$0xff] %v3337
      %p3341 = scmp.lt.s32.totalorder %s21, 1
      %s3342 = scalar_select %p3341, %s21, 1
      %s3343 = smul.addr %s3342, 8
      %s3344 = scalar_lea.vmem %s10, %s3343
      // Predicated region
      $region61: #{geo_regressor_forward.1} parent=59 // pred_check
        %p3345 = pneg %p259
      $region62: #{geo_regressor_forward.1} parent=59 // pred_check_branch
        %3347 = sbr.rel (%p3345) target = $region64
      $region63: #{geo_regressor_forward.1} parent=59 // pred_region
        _
      $region64: #{geo_regressor_forward.1} parent=59 // pred_fallthru
        _
    $region60: #{geo_regressor_forward.1} parent=5 // pred_fallthru
      _
    %p3348 = scmp.le.s32.totalorder 2, %s16
    // Predicated region
    $region65: #{geo_regressor_forward.1} parent=5 // pred_check
      %p3349 = pneg %p3348
    $region66: #{geo_regressor_forward.1} parent=5 // pred_check_branch
      %3351 = sbr.rel (%p3349) target = $region68
    $region67: #{geo_regressor_forward.1} parent=5 // pred_region
      %s3352 = ssub.s32 %s16, 2
      // Predicated region
      $region69: #{geo_regressor_forward.1} parent=67 // pred_check
        %p3353 = pneg %p265
      $region70: #{geo_regressor_forward.1} parent=67 // pred_check_branch
        %3355 = sbr.rel (%p3353) target = $region72
      $region71: #{geo_regressor_forward.1} parent=67 // pred_region
        %p3356 = scmp.lt.s32.totalorder %s22, 1
        %s3357 = scalar_select %p3356, %s22, 1
        %s3358 = smul.addr %s3357, 8
        %s3359 = scalar_lea.vmem %s10, %s3358
      $region72: #{geo_regressor_forward.1} parent=67 // pred_fallthru
        _
    $region68: #{geo_regressor_forward.1} parent=5 // pred_fallthru
      _
  $region6: #{geo_regressor_forward.1} parent=0 // loop_footer
    %s20 = sadd.s32 1, %s16
  $region7: #{geo_regressor_forward.1} parent=0 // loop_footer_branch
    %15 = sbr.rel target = $region3
  $region8: #{geo_regressor_forward.1} parent=0 // loop_exit
    _

</llo_original>
